<compile_context>
chip_gen: v7x
topology: tpu7x:2x2x1
jax: 0.10.0
libtpu: 0.0.40
codegen_flags: <defaults>
</compile_context>

<pallas_src>
import functools
import math

import jax
import jax.numpy as jnp
from jax.experimental import pallas as pl
from jax.experimental.pallas import tpu as pltpu


def _round_up(x, m):
    return (x + m - 1) // m * m


def _layer_norm(x, gamma, beta, eps):
    """The module's custom LayerNorm: gamma*(x-mean)/(std+eps)+beta with
    torch-style UNBIASED std (divide by d-1), eps added to std (not var)."""
    d = x.shape[-1]
    mean = jnp.mean(x, axis=-1, keepdims=True)
    c = x - mean
    var = jnp.sum(c * c, axis=-1, keepdims=True) / (d - 1)
    return gamma * c / (jnp.sqrt(var) + eps) + beta


# ---------------------------------------------------------------------------
# Single-buffered resident-weight BlockSpecs (probe once, eagerly).
# ---------------------------------------------------------------------------
_BUFFERED_OK = None


def _buffered_single_ok():
    """Eagerly probe whether this Pallas build accepts
    pipeline_mode=pl.Buffered(1); must be called OUTSIDE any jit trace."""
    global _BUFFERED_OK
    if _BUFFERED_OK is None:
        try:
            spec = pl.BlockSpec((8, 128), lambda i: (0, 0),
                                pipeline_mode=pl.Buffered(1))

            def _k(x_ref, o_ref):
                o_ref[...] = x_ref[...] + 1.0

            out = pl.pallas_call(
                _k,
                out_shape=jax.ShapeDtypeStruct((8, 128), jnp.float32),
                grid=(2,),
                in_specs=[spec],
                out_specs=pl.BlockSpec((8, 128), lambda i: (0, 0)),
            )(jnp.zeros((8, 128), jnp.float32))
            jax.block_until_ready(out)
            _BUFFERED_OK = True
        except Exception:  # older/newer Pallas variants: fall back, still runs
            _BUFFERED_OK = False
    return _BUFFERED_OK


def _resident_spec(shape, index_map):
    """Weights with a constant index_map stay VMEM-resident across the grid;
    single-buffer them when supported (default double-buffering wastes VMEM,
    which matters most against v7x's 64 MiB)."""
    if _BUFFERED_OK:
        return pl.BlockSpec(shape, index_map, pipeline_mode=pl.Buffered(1))
    return pl.BlockSpec(shape, index_map)


# ---------------------------------------------------------------------------
# Kernel 1: attention residual sublayer
#   y = x + W_o @ MultiHeadAttn(LN1(x), LN1(x), LN1(x), key_lengths)
# One grid step per block of Bb batch elements ("parallel" axis).
# ---------------------------------------------------------------------------
def _attn_sublayer_kernel(lens_ref, x_ref, g_ref, b_ref, wqkv_ref, bqkv_ref,
                          wo_ref, bo_ref, o_ref, ctx_ref,
                          *, heads, eps, block_batch):
    Bb = block_batch
    _, S, D = x_ref.shape
    d_k = D // heads
    dt = x_ref.dtype
    scale = 1.0 / math.sqrt(d_k)

    # Flatten the batch block into one (Bb*S, D) token slab so the projection
    # matmuls fill the MXU M dimension even for short sequences.
    x = x_ref[...].reshape(Bb * S, D)
    xf = x.astype(jnp.float32)
    xn = _layer_norm(xf, g_ref[...], b_ref[...], eps).astype(dt)

    # Fused QKV projection on the MXU, f32 accumulation.
    qkv = jnp.dot(xn, wqkv_ref[...], preferred_element_type=jnp.float32)
    qkv = qkv + bqkv_ref[...]                              # (Bb*S, 3D) f32
    # Fold the softmax scale into Q once (Bb*S*D muls instead of heads*S^2),
    # cast the whole intermediate to the input dtype a single time.
    q_all = (qkv[:, :D] * scale).astype(dt)
    k_all = qkv[:, D:2 * D].astype(dt)
    v_all = qkv[:, 2 * D:].astype(dt)

    for bi in range(Bb):                                   # static unroll
        row0 = bi * S
        # Additive mask bias built in-kernel from the per-batch key length
        # (scalar prefetch ref in SMEM) -- no (B,S,S) mask in HBM/VMEM.
        length = lens_ref[pl.program_id(0) * Bb + bi]
        k_pos = jax.lax.broadcasted_iota(jnp.int32, (1, S), 1)
        bias = jnp.where(k_pos < length, 0.0, -1e9).astype(jnp.float32)

        for h in range(heads):                             # static unroll
            lo = h * d_k                                   # lane-aligned if
            q_h = q_all[row0:row0 + S, lo:lo + d_k]        # d_k % 128 == 0
            k_h = k_all[row0:row0 + S, lo:lo + d_k]
            v_h = v_all[row0:row0 + S, lo:lo + d_k]

            # q @ k^T without materializing an explicit transpose of k.
            scores = jax.lax.dot_general(
                q_h, k_h, (((1,), (1,)), ((), ())),
                preferred_element_type=jnp.float32)
            scores = scores + bias                         # (S,S) + (1,S)
            scores = scores - jnp.max(scores, axis=-1, keepdims=True)
            e = jnp.exp(scores)
            denom = jnp.sum(e, axis=-1, keepdims=True)
            probs = e * pl.reciprocal(denom, approx=True)  # EUP, not VALU
            # attention-prob dropout == identity (eval mode)
            ctx_h = jnp.dot(probs.astype(dt), v_h,
                            preferred_element_type=jnp.float32)
            # Per-head write at a lane-aligned offset; no concatenate.
            ctx_ref[row0:row0 + S, lo:lo + d_k] = ctx_h.astype(ctx_ref.dtype)

    out = jnp.dot(ctx_ref[...], wo_ref[...], preferred_element_type=jnp.float32)
    out = out + bo_ref[...]
    # residual-block dropout == identity (eval mode)
    o_ref[...] = (xf + out).reshape(Bb, S, D).astype(o_ref.dtype)


# ---------------------------------------------------------------------------
# Kernel 2: feed-forward residual sublayer
#   out = y + W2 @ relu(W1 @ LN2(y) + b1) + b2
# Gridded over token tiles ("parallel" axis).
# ---------------------------------------------------------------------------
def _ffn_sublayer_kernel(y_ref, g_ref, b_ref, w1_ref, b1_ref, w2_ref, b2_ref,
                         o_ref, *, eps):
    y = y_ref[...]                                         # (tile, D)
    yf = y.astype(jnp.float32)
    yn = _layer_norm(yf, g_ref[...], b_ref[...], eps).astype(y_ref.dtype)

    h = jnp.dot(yn, w1_ref[...], preferred_element_type=jnp.float32) + b1_ref[...]
    h = jnp.maximum(h, 0.0).astype(y_ref.dtype)            # ReLU; dropout == id

    out = jnp.dot(h, w2_ref[...], preferred_element_type=jnp.float32) + b2_ref[...]
    # residual-block dropout == identity (eval mode)
    o_ref[...] = (yf + out).astype(o_ref.dtype)


# ---------------------------------------------------------------------------
# Tiling / budgeting heuristics
# ---------------------------------------------------------------------------
def _default_vmem_limit_bytes():
    # Explicit scoped-VMEM budget; never silently fall back to the 16/32 MiB
    # compiler default (which would reject the resident-weight design).
    try:
        cap = int(pltpu.get_tpu_info().vmem_capacity_bytes)
        return min(96 * 1024 * 1024, (cap * 3) // 4)   # 96 MiB v5e/v6e, 48 MiB v7x
    except Exception:
        return 48 * 1024 * 1024                        # safe on every generation


def _pick_block_batch(B, S, *, target_rows=256, min_programs=2):
    """Pack batch elements per grid step so the projection matmuls see up to
    ~target_rows MXU rows, while keeping >= min_programs grid steps (v7x has
    two TensorCores to shard the 'parallel' axis across)."""
    best = 1
    for bb in range(1, B + 1):
        if B % bb:
            continue
        if bb * S > max(target_rows, S):
            break
        if B // bb >= min_programs or bb == 1:
            best = bb
    return best


def _pick_token_tile(n, tm, min_programs=2):
    """Largest multiple-of-8 token tile <= tm that (a) divides n (no jnp.pad
    round trip through HBM) and (b) yields >= min_programs grid steps."""
    upper = max(8, (min(tm, _round_up(n, 8)) // 8) * 8)
    for cand in range(upper, 7, -8):          # prefer: divides n, >= 2 steps
        if n % cand == 0 and n // cand >= min_programs:
            return cand
    for cand in range(upper, 7, -8):          # next: divides n (single step)
        if n % cand == 0:
            return cand
    return upper                              # fallback: ragged n, pad


# ---------------------------------------------------------------------------
# Wrappers
# ---------------------------------------------------------------------------
@functools.partial(jax.jit, static_argnames=("heads", "eps", "block_batch",
                                             "vmem_limit_bytes"))
def _attention_sublayer(x, key_lengths, gamma, beta, w_qkv, b_qkv, w_o, b_o, *,
                        heads, eps, block_batch, vmem_limit_bytes):
    B, S, D = x.shape
    Bb = block_batch
    kernel = functools.partial(_attn_sublayer_kernel, heads=heads, eps=eps,
                               block_batch=Bb)
    return pl.pallas_call(
        kernel,
        out_shape=jax.ShapeDtypeStruct((B, S, D), x.dtype),
        grid_spec=pltpu.PrefetchScalarGridSpec(
            num_scalar_prefetch=1,                         # key_lengths -> SMEM
            grid=(B // Bb,),
            in_specs=[
                pl.BlockSpec((Bb, S, D), lambda b, lens: (b, 0, 0)),   # x
                _resident_spec((1, D), lambda b, lens: (0, 0)),        # LN1 g
                _resident_spec((1, D), lambda b, lens: (0, 0)),        # LN1 b
                _resident_spec((D, 3 * D), lambda b, lens: (0, 0)),    # W_qkv
                _resident_spec((1, 3 * D), lambda b, lens: (0, 0)),    # b_qkv
                _resident_spec((D, D), lambda b, lens: (0, 0)),        # W_o
                _resident_spec((1, D), lambda b, lens: (0, 0)),        # b_o
            ],
            out_specs=pl.BlockSpec((Bb, S, D), lambda b, lens: (b, 0, 0)),
            scratch_shapes=[pltpu.VMEM((Bb * S, D), x.dtype)],          # ctx
        ),
        compiler_params=pltpu.CompilerParams(
            dimension_semantics=("parallel",),
            vmem_limit_bytes=vmem_limit_bytes),
    )(key_lengths, x, gamma, beta, w_qkv, b_qkv, w_o, b_o)


@functools.partial(jax.jit, static_argnames=("tm", "eps", "vmem_limit_bytes"))
def _ffn_sublayer(y, gamma, beta, w1, b1, w2, b2, *, tm, eps, vmem_limit_bytes):
    B, S, D = y.shape
    d_ff = w1.shape[1]
    y2 = y.reshape(-1, D)
    n = y2.shape[0]
    tile = _pick_token_tile(n, tm)
    n_pad = _round_up(n, tile)
    if n_pad != n:
        # Only hit when no multiple-of-8 tile divides n (ragged tiny inputs).
        y2 = jnp.pad(y2, ((0, n_pad - n), (0, 0)))

    kernel = functools.partial(_ffn_sublayer_kernel, eps=eps)
    out = pl.pallas_call(
        kernel,
        out_shape=jax.ShapeDtypeStruct((n_pad, D), y.dtype),
        grid_spec=pltpu.PrefetchScalarGridSpec(
            num_scalar_prefetch=0,
            grid=(n_pad // tile,),
            in_specs=[
                pl.BlockSpec((tile, D), lambda i: (i, 0)),             # tokens
                _resident_spec((1, D), lambda i: (0, 0)),              # LN2 g
                _resident_spec((1, D), lambda i: (0, 0)),              # LN2 b
                _resident_spec((D, d_ff), lambda i: (0, 0)),           # W1
                _resident_spec((1, d_ff), lambda i: (0, 0)),           # b1
                _resident_spec((d_ff, D), lambda i: (0, 0)),           # W2
                _resident_spec((1, D), lambda i: (0, 0)),              # b2
            ],
            out_specs=pl.BlockSpec((tile, D), lambda i: (i, 0)),
        ),
        compiler_params=pltpu.CompilerParams(
            dimension_semantics=("parallel",),
            vmem_limit_bytes=vmem_limit_bytes),
    )(y2, gamma, beta, w1, b1, w2, b2)
    if n_pad != n:
        out = out[:n]
    return out.reshape(B, S, D)


def prepare_encoder_params(p):
    """One-time parameter packing (call once at setup, NOT per forward pass):
    fused QKV weight/bias and 2-D LN params / biases."""
    D = p["w_q"].shape[0]
    d_ff = p["w_1"].shape[1]
    return dict(
        ln1_g=p["ln1_gamma"].reshape(1, D), ln1_b=p["ln1_beta"].reshape(1, D),
        ln2_g=p["ln2_gamma"].reshape(1, D), ln2_b=p["ln2_beta"].reshape(1, D),
        w_qkv=jnp.concatenate([p["w_q"], p["w_k"], p["w_v"]], axis=1),
        b_qkv=jnp.concatenate([p["b_q"], p["b_k"], p["b_v"]]).reshape(1, 3 * D),
        w_o=p["w_o"], b_o=p["b_o"].reshape(1, D),
        w_1=p["w_1"], b_1=p["b_1"].reshape(1, d_ff),
        w_2=p["w_2"], b_2=p["b_2"].reshape(1, D),
    )


def encoder_block_forward(x, key_lengths, packed, *, heads, eps=1e-6, tm=512,
                          vmem_limit_bytes=None):
    """EncoderBlock.forward in eval mode (dropout == identity):
         y   = x + SelfAttn(LN1(x), LN1(x), LN1(x), mask)
         out = y + FFN(LN2(y))
    x:           [batch, seq, d_model]
    key_lengths: [batch] int32; key-padding mask mask[b,:,k] = 1 iff k < len[b].
    packed:      output of prepare_encoder_params().
    """
    B, S, D = x.shape
    assert D % heads == 0
    if vmem_limit_bytes is None:
        vmem_limit_bytes = _default_vmem_limit_bytes()
    _buffered_single_ok()          # resolve the Buffered(1) probe outside jit
    bb = _pick_block_batch(B, S)
    y = _attention_sublayer(
        x, key_lengths.astype(jnp.int32), packed["ln1_g"], packed["ln1_b"],
        packed["w_qkv"], packed["b_qkv"], packed["w_o"], packed["b_o"],
        heads=heads, eps=eps, block_batch=bb,
        vmem_limit_bytes=vmem_limit_bytes)
    return _ffn_sublayer(
        y, packed["ln2_g"], packed["ln2_b"],
        packed["w_1"], packed["b_1"], packed["w_2"], packed["b_2"],
        tm=tm, eps=eps, vmem_limit_bytes=vmem_limit_bytes)


# ---------------------------------------------------------------------------
# Pure-JAX reference (same eval-mode semantics) for correctness checking.
# ---------------------------------------------------------------------------
def _reference_encoder_block(x, key_lengths, p, *, heads, eps=1e-6):
    def ln(v, g, b):
        mean = v.mean(-1, keepdims=True)
        var = jnp.sum((v - mean) ** 2, -1, keepdims=True) / (v.shape[-1] - 1)
        return g * (v - mean) / (jnp.sqrt(var) + eps) + b

    B, S, D = x.shape
    dk = D // heads
    key_valid = jnp.arange(S)[None, :] < key_lengths[:, None]      # (B, S)

    def mha(q_in, k_in, v_in):
        def split(t):  # (B, S, D) -> (B, H, S, dk)
            return t.reshape(B, S, heads, dk).transpose(0, 2, 1, 3)

        q = split(q_in @ p["w_q"] + p["b_q"])
        k = split(k_in @ p["w_k"] + p["b_k"])
        v = split(v_in @ p["w_v"] + p["b_v"])
        scores = jnp.einsum("bhqd,bhkd->bhqk", q, k) / math.sqrt(dk)
        scores = jnp.where(key_valid[:, None, None, :], scores, -1e9)
        probs = jax.nn.softmax(scores, axis=-1)
        ctx = jnp.einsum("bhqk,bhkd->bhqd", probs, v)
        ctx = ctx.transpose(0, 2, 1, 3).reshape(B, S, D)
        return ctx @ p["w_o"] + p["b_o"]

    def ffn(v):
        return jnp.maximum(v @ p["w_1"] + p["b_1"], 0.0) @ p["w_2"] + p["b_2"]

    xn = ln(x, p["ln1_gamma"], p["ln1_beta"])
    y = x + mha(xn, xn, xn)
    return y + ffn(ln(y, p["ln2_gamma"], p["ln2_beta"]))


if __name__ == "__main__":
    batch, seq, heads = 2, 16, 2
    d_model, d_ff = 256, 512          # multiples of 128 -> lane-dense vregs

    root = jax.random.PRNGKey(0)
    ks = jax.random.split(root, 7)
    x = jax.random.normal(ks[0], (batch, seq, d_model), jnp.float32)

    # Key-padding mask expressed as per-batch valid-key lengths.
    key_lengths = jnp.array([seq, seq - 5], jnp.int32)

    def init_linear(key, fan_in, fan_out):
        kw, kb = jax.random.split(key)
        bound = 1.0 / math.sqrt(fan_in)
        w = jax.random.uniform(kw, (fan_in, fan_out), jnp.float32, -bound, bound)
        b = jax.random.uniform(kb, (fan_out,), jnp.float32, -bound, bound)
        return w, b

    w_q, b_q = init_linear(ks[1], d_model, d_model)
    w_k, b_k = init_linear(ks[2], d_model, d_model)
    w_v, b_v = init_linear(ks[3], d_model, d_model)
    w_o, b_o = init_linear(ks[4], d_model, d_model)
    w_1, b_1 = init_linear(ks[5], d_model, d_ff)
    w_2, b_2 = init_linear(ks[6], d_ff, d_model)

    params = dict(
        ln1_gamma=jnp.ones((d_model,), jnp.float32),
        ln1_beta=jnp.zeros((d_model,), jnp.float32),
        ln2_gamma=jnp.ones((d_model,), jnp.float32),
        ln2_beta=jnp.zeros((d_model,), jnp.float32),
        w_q=w_q, b_q=b_q, w_k=w_k, b_k=b_k, w_v=w_v, b_v=b_v,
        w_o=w_o, b_o=b_o, w_1=w_1, b_1=b_1, w_2=w_2, b_2=b_2,
    )

    packed = prepare_encoder_params(params)   # one-time packing, outside jit
    out = encoder_block_forward(x, key_lengths, packed, heads=heads)
    jax.block_until_ready(out)

    ref = _reference_encoder_block(x, key_lengths, params, heads=heads)
    assert out.shape == x.shape
    # Tolerance covers TPU default-precision matmuls (bf16 operand passes) and
    # the approximate EUP reciprocal used in the softmax denominator.
    max_err = float(jnp.max(jnp.abs(out - ref)))
    assert jnp.allclose(out, ref, atol=5e-3, rtol=5e-3), f"max abs err {max_err}"

    print("KERNEL_OK")
</pallas_src>

<mosaic_0001>
module attributes {stable_mosaic.version = 11 : i64} {
  func.func @_k(%arg0: i32, %arg1: memref<8x128xf32, #tpu.memory_space<vmem>>, %arg2: memref<8x128xf32, #tpu.memory_space<vmem>>) attributes {dimension_semantics = [#tpu.dimension_semantics<arbitrary>], iteration_bounds = array<i64: 2>, scalar_prefetch = 0 : i64, scratch_operands = 0 : i64, tpu.core_type = #tpu.core_type<tc>, window_params = [{pipeline_mode = #tpu.pipeline_mode<synchronous>, transform_indices = @transform_0, window_bounds = array<i64: 8, 128>}, {pipeline_mode = #tpu.pipeline_mode<synchronous>, transform_indices = @transform_1, window_bounds = array<i64: 8, 128>}]} {
    %c0 = arith.constant 0 : index
    %c0_0 = arith.constant 0 : index
    %0 = vector.load %arg1[%c0, %c0_0] : memref<8x128xf32, #tpu.memory_space<vmem>>, vector<8x128xf32>
    %cst = arith.constant 1.000000e+00 : f32
    %1 = vector.broadcast %cst : f32 to vector<8x128xf32>
    %2 = arith.addf %0, %1 : vector<8x128xf32>
    %c0_1 = arith.constant 0 : index
    %c0_2 = arith.constant 0 : index
    %3 = vector.load %arg2[%c0_1, %c0_2] : memref<8x128xf32, #tpu.memory_space<vmem>>, vector<8x128xf32>
    tpu.vector_store %arg2[%c0_1, %c0_2], %2 {strides = array<i32>} : memref<8x128xf32, #tpu.memory_space<vmem>>, vector<8x128xf32>,
    return
  }
  func.func @transform_0(%arg0: i32) -> (i32, i32) {
    %c0_i32 = arith.constant 0 : i32
    %c0_i32_0 = arith.constant 0 : i32
    %c0_i32_1 = arith.constant 0 : i32
    return %c0_i32, %c0_i32_0 : i32, i32
  }
  func.func @transform_1(%arg0: i32) -> (i32, i32) {
    %c0_i32 = arith.constant 0 : i32
    %c0_i32_0 = arith.constant 0 : i32
    %c0_i32_1 = arith.constant 0 : i32
    return %c0_i32, %c0_i32_0 : i32, i32
  }
}

module attributes {stable_mosaic.version = 11 : i64} {
  func.func @_attn_sublayer_kernel(%arg0: i32, %arg1: memref<2xi32, #tpu.memory_space<smem>>, %arg2: memref<1x16x256xf32, #tpu.memory_space<vmem>>, %arg3: memref<1x256xf32, #tpu.memory_space<vmem>>, %arg4: memref<1x256xf32, #tpu.memory_space<vmem>>, %arg5: memref<256x768xf32, #tpu.memory_space<vmem>>, %arg6: memref<1x768xf32, #tpu.memory_space<vmem>>, %arg7: memref<256x256xf32, #tpu.memory_space<vmem>>, %arg8: memref<1x256xf32, #tpu.memory_space<vmem>>, %arg9: memref<1x16x256xf32, #tpu.memory_space<vmem>>, %arg10: memref<16x256xf32, #tpu.memory_space<vmem>>) attributes {dimension_semantics = [#tpu.dimension_semantics<parallel>], iteration_bounds = array<i64: 2>, scalar_prefetch = 1 : i64, scratch_operands = 1 : i64, tpu.core_type = #tpu.core_type<tc>, window_params = [{transform_indices = @transform_0, window_bounds = array<i64: 1, 16, 256>}, {pipeline_mode = #tpu.pipeline_mode<synchronous>, transform_indices = @transform_1, window_bounds = array<i64: 1, 256>}, {pipeline_mode = #tpu.pipeline_mode<synchronous>, transform_indices = @transform_2, window_bounds = array<i64: 1, 256>}, {pipeline_mode = #tpu.pipeline_mode<synchronous>, transform_indices = @transform_3, window_bounds = array<i64: 256, 768>}, {pipeline_mode = #tpu.pipeline_mode<synchronous>, transform_indices = @transform_4, window_bounds = array<i64: 1, 768>}, {pipeline_mode = #tpu.pipeline_mode<synchronous>, transform_indices = @transform_5, window_bounds = array<i64: 256, 256>}, {pipeline_mode = #tpu.pipeline_mode<synchronous>, transform_indices = @transform_6, window_bounds = array<i64: 1, 256>}, {transform_indices = @transform_7, window_bounds = array<i64: 1, 16, 256>}]} {
    %c0 = arith.constant 0 : index
    %c0_0 = arith.constant 0 : index
    %c0_1 = arith.constant 0 : index
    %0 = vector.load %arg2[%c0, %c0_0, %c0_1] : memref<1x16x256xf32, #tpu.memory_space<vmem>>, vector<1x16x256xf32>
    %1 = vector.shape_cast %0 : vector<1x16x256xf32> to vector<16x256xf32>
    %c0_2 = arith.constant 0 : index
    %c0_3 = arith.constant 0 : index
    %2 = vector.load %arg3[%c0_2, %c0_3] : memref<1x256xf32, #tpu.memory_space<vmem>>, vector<1x256xf32>
    %c0_4 = arith.constant 0 : index
    %c0_5 = arith.constant 0 : index
    %3 = vector.load %arg4[%c0_4, %c0_5] : memref<1x256xf32, #tpu.memory_space<vmem>>, vector<1x256xf32>
    %cst = arith.constant dense<0.000000e+00> : vector<16xf32>
    %4 = vector.multi_reduction <add>, %1, %cst [1] : vector<16x256xf32> to vector<16xf32>
    %5 = vector.shape_cast %4 : vector<16xf32> to vector<16x1xf32>
    %cst_6 = arith.constant 2.560000e+02 : f32
    %6 = vector.broadcast %cst_6 : f32 to vector<16x1xf32>
    %7 = arith.divf %5, %6 : vector<16x1xf32>
    %8 = vector.broadcast %7 : vector<16x1xf32> to vector<16x256xf32>
    %9 = arith.subf %1, %8 : vector<16x256xf32>
    %10 = arith.mulf %9, %9 : vector<16x256xf32>
    %cst_7 = arith.constant dense<0.000000e+00> : vector<16xf32>
    %11 = vector.multi_reduction <add>, %10, %cst_7 [1] : vector<16x256xf32> to vector<16xf32>
    %12 = vector.shape_cast %11 : vector<16xf32> to vector<16x1xf32>
    %cst_8 = arith.constant 2.550000e+02 : f32
    %13 = vector.broadcast %cst_8 : f32 to vector<16x1xf32>
    %14 = arith.divf %12, %13 : vector<16x1xf32>
    %15 = vector.broadcast %2 : vector<1x256xf32> to vector<16x256xf32>
    %16 = arith.mulf %15, %9 : vector<16x256xf32>
    %17 = math.sqrt %14 : vector<16x1xf32>
    %cst_9 = arith.constant 9.99999997E-7 : f32
    %18 = vector.broadcast %cst_9 : f32 to vector<16x1xf32>
    %19 = arith.addf %17, %18 : vector<16x1xf32>
    %20 = vector.broadcast %19 : vector<16x1xf32> to vector<16x256xf32>
    %21 = arith.divf %16, %20 : vector<16x256xf32>
    %22 = vector.broadcast %3 : vector<1x256xf32> to vector<16x256xf32>
    %23 = arith.addf %21, %22 : vector<16x256xf32>
    %c0_10 = arith.constant 0 : index
    %c0_11 = arith.constant 0 : index
    %24 = vector.load %arg5[%c0_10, %c0_11] : memref<256x768xf32, #tpu.memory_space<vmem>>, vector<256x768xf32>
    %cst_12 = arith.constant dense<0.000000e+00> : vector<16x768xf32>
    %25 = tpu.matmul %23, %24, %cst_12 {dimension_numbers = #tpu.dot_dimension_numbers<[1], [0], [0], [1], [0, 0, 1, 1], [], []>} : vector<16x256xf32>, vector<256x768xf32>, vector<16x768xf32> -> vector<16x768xf32>
    %c0_13 = arith.constant 0 : index
    %c0_14 = arith.constant 0 : index
    %26 = vector.load %arg6[%c0_13, %c0_14] : memref<1x768xf32, #tpu.memory_space<vmem>>, vector<1x768xf32>
    %27 = vector.broadcast %26 : vector<1x768xf32> to vector<16x768xf32>
    %28 = arith.addf %25, %27 : vector<16x768xf32>
    %29 = vector.extract_strided_slice %28 {offsets = [0, 0], sizes = [16, 256], strides = [1, 1]} : vector<16x768xf32> to vector<16x256xf32>
    %cst_15 = arith.constant 0.0883883461 : f32
    %30 = vector.broadcast %cst_15 : f32 to vector<16x256xf32>
    %31 = arith.mulf %29, %30 : vector<16x256xf32>
    %32 = vector.extract_strided_slice %28 {offsets = [0, 256], sizes = [16, 256], strides = [1, 1]} : vector<16x768xf32> to vector<16x256xf32>
    %33 = vector.extract_strided_slice %28 {offsets = [0, 512], sizes = [16, 256], strides = [1, 1]} : vector<16x768xf32> to vector<16x256xf32>
    %c1_i32 = arith.constant 1 : i32
    %34 = arith.muli %arg0, %c1_i32 : i32
    %c0_i32 = arith.constant 0 : i32
    %35 = arith.addi %34, %c0_i32 : i32
    %36 = arith.index_cast %35 : i32 to index
    %37 = memref.load %arg1[%36] : memref<2xi32, #tpu.memory_space<smem>>
    %38 = tpu.iota {dimensions = array<i32: 1>} : vector<1x16xi32>
    %39 = vector.broadcast %37 : i32 to vector<1x16xi32>
    %40 = arith.cmpi slt, %38, %39 : vector<1x16xi32>
    %cst_16 = arith.constant 0.000000e+00 : f32
    %cst_17 = arith.constant -1.000000e+09 : f32
    %41 = vector.broadcast %cst_16 : f32 to vector<1x16xf32>
    %42 = vector.broadcast %cst_17 : f32 to vector<1x16xf32>
    %43 = arith.select %40, %41, %42 : vector<1x16xi1>, vector<1x16xf32>
    %44 = vector.extract_strided_slice %31 {offsets = [0, 0], sizes = [16, 128], strides = [1, 1]} : vector<16x256xf32> to vector<16x128xf32>
    %45 = vector.extract_strided_slice %32 {offsets = [0, 0], sizes = [16, 128], strides = [1, 1]} : vector<16x256xf32> to vector<16x128xf32>
    %46 = vector.extract_strided_slice %33 {offsets = [0, 0], sizes = [16, 128], strides = [1, 1]} : vector<16x256xf32> to vector<16x128xf32>
    %cst_18 = arith.constant dense<0.000000e+00> : vector<16x16xf32>
    %47 = tpu.matmul %44, %45, %cst_18 {dimension_numbers = #tpu.dot_dimension_numbers<[1], [1], [0], [0], [0, 0, 1, 0], [], []>} : vector<16x128xf32>, vector<16x128xf32>, vector<16x16xf32> -> vector<16x16xf32>
    %48 = vector.broadcast %43 : vector<1x16xf32> to vector<16x16xf32>
    %49 = arith.addf %47, %48 : vector<16x16xf32>
    %cst_19 = arith.constant dense<0xFF800000> : vector<16xf32>
    %50 = vector.multi_reduction <maximumf>, %49, %cst_19 [1] : vector<16x16xf32> to vector<16xf32>
    %51 = vector.shape_cast %50 : vector<16xf32> to vector<16x1xf32>
    %52 = vector.broadcast %51 : vector<16x1xf32> to vector<16x16xf32>
    %53 = arith.subf %49, %52 : vector<16x16xf32>
    %54 = math.exp %53 : vector<16x16xf32>
    %cst_20 = arith.constant dense<0.000000e+00> : vector<16xf32>
    %55 = vector.multi_reduction <add>, %54, %cst_20 [1] : vector<16x16xf32> to vector<16xf32>
    %56 = vector.shape_cast %55 : vector<16xf32> to vector<16x1xf32>
    %57 = tpu.reciprocal %56 {approx = true} : vector<16x1xf32> -> vector<16x1xf32>
    %58 = vector.broadcast %57 : vector<16x1xf32> to vector<16x16xf32>
    %59 = arith.mulf %54, %58 : vector<16x16xf32>
    %cst_21 = arith.constant dense<0.000000e+00> : vector<16x128xf32>
    %60 = tpu.matmul %59, %46, %cst_21 {dimension_numbers = #tpu.dot_dimension_numbers<[1], [0], [0], [1], [0, 0, 1, 1], [], []>} : vector<16x16xf32>, vector<16x128xf32>, vector<16x128xf32> -> vector<16x128xf32>
    %c0_22 = arith.constant 0 : index
    %c0_23 = arith.constant 0 : index
    %61 = vector.load %arg10[%c0_22, %c0_23] : memref<16x256xf32, #tpu.memory_space<vmem>>, vector<16x128xf32>
    tpu.vector_store %arg10[%c0_22, %c0_23], %60 {strides = array<i32>} : memref<16x256xf32, #tpu.memory_space<vmem>>, vector<16x128xf32>,
    %62 = vector.extract_strided_slice %31 {offsets = [0, 128], sizes = [16, 128], strides = [1, 1]} : vector<16x256xf32> to vector<16x128xf32>
    %63 = vector.extract_strided_slice %32 {offsets = [0, 128], sizes = [16, 128], strides = [1, 1]} : vector<16x256xf32> to vector<16x128xf32>
    %64 = vector.extract_strided_slice %33 {offsets = [0, 128], sizes = [16, 128], strides = [1, 1]} : vector<16x256xf32> to vector<16x128xf32>
    %cst_24 = arith.constant dense<0.000000e+00> : vector<16x16xf32>
    %65 = tpu.matmul %62, %63, %cst_24 {dimension_numbers = #tpu.dot_dimension_numbers<[1], [1], [0], [0], [0, 0, 1, 0], [], []>} : vector<16x128xf32>, vector<16x128xf32>, vector<16x16xf32> -> vector<16x16xf32>
    %66 = vector.broadcast %43 : vector<1x16xf32> to vector<16x16xf32>
    %67 = arith.addf %65, %66 : vector<16x16xf32>
    %cst_25 = arith.constant dense<0xFF800000> : vector<16xf32>
    %68 = vector.multi_reduction <maximumf>, %67, %cst_25 [1] : vector<16x16xf32> to vector<16xf32>
    %69 = vector.shape_cast %68 : vector<16xf32> to vector<16x1xf32>
    %70 = vector.broadcast %69 : vector<16x1xf32> to vector<16x16xf32>
    %71 = arith.subf %67, %70 : vector<16x16xf32>
    %72 = math.exp %71 : vector<16x16xf32>
    %cst_26 = arith.constant dense<0.000000e+00> : vector<16xf32>
    %73 = vector.multi_reduction <add>, %72, %cst_26 [1] : vector<16x16xf32> to vector<16xf32>
    %74 = vector.shape_cast %73 : vector<16xf32> to vector<16x1xf32>
    %75 = tpu.reciprocal %74 {approx = true} : vector<16x1xf32> -> vector<16x1xf32>
    %76 = vector.broadcast %75 : vector<16x1xf32> to vector<16x16xf32>
    %77 = arith.mulf %72, %76 : vector<16x16xf32>
    %cst_27 = arith.constant dense<0.000000e+00> : vector<16x128xf32>
    %78 = tpu.matmul %77, %64, %cst_27 {dimension_numbers = #tpu.dot_dimension_numbers<[1], [0], [0], [1], [0, 0, 1, 1], [], []>} : vector<16x16xf32>, vector<16x128xf32>, vector<16x128xf32> -> vector<16x128xf32>
    %c0_28 = arith.constant 0 : index
    %c128 = arith.constant 128 : index
    %79 = vector.load %arg10[%c0_28, %c128] : memref<16x256xf32, #tpu.memory_space<vmem>>, vector<16x128xf32>
    tpu.vector_store %arg10[%c0_28, %c128], %78 {strides = array<i32>} : memref<16x256xf32, #tpu.memory_space<vmem>>, vector<16x128xf32>,
    %c0_29 = arith.constant 0 : index
    %c0_30 = arith.constant 0 : index
    %80 = vector.load %arg10[%c0_29, %c0_30] : memref<16x256xf32, #tpu.memory_space<vmem>>, vector<16x256xf32>
    %c0_31 = arith.constant 0 : index
    %c0_32 = arith.constant 0 : index
    %81 = vector.load %arg7[%c0_31, %c0_32] : memref<256x256xf32, #tpu.memory_space<vmem>>, vector<256x256xf32>
    %cst_33 = arith.constant dense<0.000000e+00> : vector<16x256xf32>
    %82 = tpu.matmul %80, %81, %cst_33 {dimension_numbers = #tpu.dot_dimension_numbers<[1], [0], [0], [1], [0, 0, 1, 1], [], []>} : vector<16x256xf32>, vector<256x256xf32>, vector<16x256xf32> -> vector<16x256xf32>
    %c0_34 = arith.constant 0 : index
    %c0_35 = arith.constant 0 : index
    %83 = vector.load %arg8[%c0_34, %c0_35] : memref<1x256xf32, #tpu.memory_space<vmem>>, vector<1x256xf32>
    %84 = vector.broadcast %83 : vector<1x256xf32> to vector<16x256xf32>
    %85 = arith.addf %82, %84 : vector<16x256xf32>
    %86 = arith.addf %1, %85 : vector<16x256xf32>
    %87 = vector.shape_cast %86 : vector<16x256xf32> to vector<1x16x256xf32>
    %c0_36 = arith.constant 0 : index
    %c0_37 = arith.constant 0 : index
    %c0_38 = arith.constant 0 : index
    %88 = vector.load %arg9[%c0_36, %c0_37, %c0_38] : memref<1x16x256xf32, #tpu.memory_space<vmem>>, vector<1x16x256xf32>
    tpu.vector_store %arg9[%c0_36, %c0_37, %c0_38], %87 {strides = array<i32>} : memref<1x16x256xf32, #tpu.memory_space<vmem>>, vector<1x16x256xf32>,
    return
  }
  func.func @transform_0(%arg0: i32, %arg1: memref<2xi32, #tpu.memory_space<smem>>) -> (i32, i32, i32) {
    %c0_i32 = arith.constant 0 : i32
    %c0_i32_0 = arith.constant 0 : i32
    %c0_i32_1 = arith.constant 0 : i32
    return %arg0, %c0_i32, %c0_i32_0 : i32, i32, i32
  }
  func.func @transform_1(%arg0: i32, %arg1: memref<2xi32, #tpu.memory_space<smem>>) -> (i32, i32) {
    %c0_i32 = arith.constant 0 : i32
    %c0_i32_0 = arith.constant 0 : i32
    %c0_i32_1 = arith.constant 0 : i32
    return %c0_i32, %c0_i32_0 : i32, i32
  }
  func.func @transform_2(%arg0: i32, %arg1: memref<2xi32, #tpu.memory_space<smem>>) -> (i32, i32) {
    %c0_i32 = arith.constant 0 : i32
    %c0_i32_0 = arith.constant 0 : i32
    %c0_i32_1 = arith.constant 0 : i32
    return %c0_i32, %c0_i32_0 : i32, i32
  }
  func.func @transform_3(%arg0: i32, %arg1: memref<2xi32, #tpu.memory_space<smem>>) -> (i32, i32) {
    %c0_i32 = arith.constant 0 : i32
    %c0_i32_0 = arith.constant 0 : i32
    %c0_i32_1 = arith.constant 0 : i32
    return %c0_i32, %c0_i32_0 : i32, i32
  }
  func.func @transform_4(%arg0: i32, %arg1: memref<2xi32, #tpu.memory_space<smem>>) -> (i32, i32) {
    %c0_i32 = arith.constant 0 : i32
    %c0_i32_0 = arith.constant 0 : i32
    %c0_i32_1 = arith.constant 0 : i32
    return %c0_i32, %c0_i32_0 : i32, i32
  }
  func.func @transform_5(%arg0: i32, %arg1: memref<2xi32, #tpu.memory_space<smem>>) -> (i32, i32) {
    %c0_i32 = arith.constant 0 : i32
    %c0_i32_0 = arith.constant 0 : i32
    %c0_i32_1 = arith.constant 0 : i32
    return %c0_i32, %c0_i32_0 : i32, i32
  }
  func.func @transform_6(%arg0: i32, %arg1: memref<2xi32, #tpu.memory_space<smem>>) -> (i32, i32) {
    %c0_i32 = arith.constant 0 : i32
    %c0_i32_0 = arith.constant 0 : i32
    %c0_i32_1 = arith.constant 0 : i32
    return %c0_i32, %c0_i32_0 : i32, i32
  }
  func.func @transform_7(%arg0: i32, %arg1: memref<2xi32, #tpu.memory_space<smem>>) -> (i32, i32, i32) {
    %c0_i32 = arith.constant 0 : i32
    %c0_i32_0 = arith.constant 0 : i32
    %c0_i32_1 = arith.constant 0 : i32
    return %arg0, %c0_i32, %c0_i32_0 : i32, i32, i32
  }
}

</mosaic_0001>

<llo_original>
// kernel: tpu_custom_call.1
$region0: #{tpu_custom_call.1}
  #allocation0 [shape = 'u32[]', space=smem, size = 0x4, offset = 0x4, fixed_abs, tag = 'smem constant byte address 0x4 - core index']
  #allocation1 [shape = 'u32[144,128]{1,0:T(1,128)}', space=vmem, size = 0x12000, scoped, tag = 'internal scratch']
  %s0 = inlined_call_operand.hbm [shape: f32[8,128], index: 0, kind: input, shape index: {}]
  %s1 = inlined_call_operand.hbm [shape: f32[8,128], index: 1, kind: output, shape index: {}]
  %s2 = sld [smem:[#allocation0]]
  $region41: #{tpu_custom_call.1} parent=0
    _
  %s4 = ssub.s32 1, %s2
  %s5 = scalar_select 0, %s4, %s2
  $region1: #{tpu_custom_call.1} parent=0
    #allocation2 [shape = 'u8[4096]{0}', space=vmem, size = 0x1000, scoped, tag = 'input window, operand 0, single buffered']
    #allocation3 [shape = 's32[2]{0}', space=sflag, size = 0x8, scoped, tag = 'scoped memory for tpu_custom_call.1']
    #allocation4 [shape = 's32[2]{0}', space=sflag, size = 0x8, scoped, tag = 'scoped memory for tpu_custom_call.1']
    #allocation5 [shape = 'u8[4096]{0}', space=vmem, size = 0x1000, scoped, tag = 'output window, operand 0, single buffered']
    %6 = vsyncpa [#allocation3], 0
    %7 = vsyncpa [#allocation4], 0
    loop: start=0, step=1, limit=4
    $region2: #{tpu_custom_call.1} parent=1 // loop_pre_header
      _
    $region3: #{tpu_custom_call.1} parent=1 // loop_header
      %s9 = sphi 0, %s13
      %p10 = scmp.ge.s32.totalorder %s9, 4
      %s17 = sphi 0, %s17
      %s19 = sphi 0, %s17
      %s20 = sphi 0, %s19
      %s34 = sphi 0, %s20
      %s38 = sphi 0, %s38
      %s40 = sphi 0, %s38
      %s41 = sphi 0, %s40
      %s55 = sphi 0, %s41
    $region4: #{tpu_custom_call.1} parent=1 // loop_header_branch
      %12 = sbr.rel (%p10) target = $region8
    $region5: #{tpu_custom_call.1} parent=1 // loop_body
      %s14 = ssub.s32 %s9, 1
      %s15 = ssub.s32 %s9, 2
      %s16 = sadd.s32 %s9, 1
      %s18 = sadd.s32 %s17, 1
      %p21 = scmp.eq.s32.totalorder %s9, 1
      %p22 = scmp.ne.s32.totalorder %s17, %s19
      %p23 = scmp.eq.s32.totalorder %s9, 0
      %p24 = por %p22, %p23
      %p25 = scmp.ne.s32.totalorder %s17, %s19
      %p26 = scmp.eq.s32.totalorder %s14, 1
      %p27 = por %p25, %p26
      %p28 = scmp.ne.s32.totalorder %s19, %s20
      %p29 = scmp.eq.s32.totalorder %s14, 0
      %p30 = por %p28, %p29
      %p31 = scmp.ne.s32.totalorder %s19, %s20
      %p32 = scmp.eq.s32.totalorder %s15, 1
      %p33 = por %p31, %p32
      %p35 = scmp.ne.s32.totalorder %s20, %s34
      %p36 = scmp.eq.s32.totalorder %s15, 0
      %p37 = por %p35, %p36
      %s39 = sadd.s32 %s38, 1
      %p42 = scmp.eq.s32.totalorder %s9, 1
      %p43 = scmp.ne.s32.totalorder %s38, %s40
      %p44 = scmp.eq.s32.totalorder %s9, 0
      %p45 = por %p43, %p44
      %p46 = scmp.ne.s32.totalorder %s38, %s40
      %p47 = scmp.eq.s32.totalorder %s14, 1
      %p48 = por %p46, %p47
      %p49 = scmp.ne.s32.totalorder %s40, %s41
      %p50 = scmp.eq.s32.totalorder %s14, 0
      %p51 = por %p49, %p50
      %p52 = scmp.ne.s32.totalorder %s40, %s41
      %p53 = scmp.eq.s32.totalorder %s15, 1
      %p54 = por %p52, %p53
      %p56 = scmp.ne.s32.totalorder %s41, %s55
      %p57 = scmp.eq.s32.totalorder %s15, 0
      %p58 = por %p56, %p57
      %p59 = scmp.le.s32.totalorder 1, %s9
      %p60 = scmp.lt.s32.totalorder %s9, 3
      %p61 = pnand %p59, %p60
      %p62 = pneg %p61
      // Predicated region
      $region9: #{tpu_custom_call.1} parent=5 // pred_check
        _
      $region10: #{tpu_custom_call.1} parent=5 // pred_check_branch
        %64 = sbr.rel (%p61) target = $region12
      $region11: #{tpu_custom_call.1} parent=5 // pred_region
        %s65 = ssub.s32 %s9, 1
        // Predicated region
        $region13: #{tpu_custom_call.1} parent=11 // pred_check
          %p66 = pneg %p30
        $region14: #{tpu_custom_call.1} parent=11 // pred_check_branch
          %68 = sbr.rel (%p66) target = $region16
        $region15: #{tpu_custom_call.1} parent=11 // pred_region
          %s70 = ssub.s32 128, 128
          %71 = vsyncadd [#allocation3], %s70
          %s73 = sshll.u32 [#allocation2], 4
          %s74 = int_to_ptr.vmem [resolvable:$true] %s73
          %76 = dma.hbm_to_vmem [thread:$0]  %s0, 128, %s74, [#allocation3]
        $region16: #{tpu_custom_call.1} parent=11 // pred_fallthru
          _
      $region12: #{tpu_custom_call.1} parent=5 // pred_fallthru
        _
      %p77 = scmp.lt.s32.totalorder %s9, 2
      // Predicated region
      $region17: #{tpu_custom_call.1} parent=5 // pred_check
        %p78 = pneg %p77
      $region18: #{tpu_custom_call.1} parent=5 // pred_check_branch
        %80 = sbr.rel (%p78) target = $region20
      $region19: #{tpu_custom_call.1} parent=5 // pred_region
        _
      $region20: #{tpu_custom_call.1} parent=5 // pred_fallthru
        _
      %p81 = scmp.le.s32.totalorder 1, %s9
      %p82 = scmp.lt.s32.totalorder %s9, 3
      %p83 = pnand %p81, %p82
      %p84 = pneg %p83
      // Predicated region
      $region21: #{tpu_custom_call.1} parent=5 // pred_check
        _
      $region22: #{tpu_custom_call.1} parent=5 // pred_check_branch
        %86 = sbr.rel (%p83) target = $region24
      $region23: #{tpu_custom_call.1} parent=5 // pred_region
        %s87 = ssub.s32 %s9, 1
        // Predicated region
        $region25: #{tpu_custom_call.1} parent=23 // pred_check
          %p88 = pneg %p30
        $region26: #{tpu_custom_call.1} parent=23 // pred_check_branch
          %90 = sbr.rel (%p88) target = $region28
        $region27: #{tpu_custom_call.1} parent=23 // pred_region
          %91 = dma.done [#allocation3], 128
        $region28: #{tpu_custom_call.1} parent=23 // pred_fallthru
          _
        %p92 = pneg %p30
        %p93 = pneg %p27
        %p94 = pneg %p51
        %p95 = pneg %p48
        %v96 = vld [vmem:[#allocation2] sm:$0xff]
        %v97 = vadd.f32 %v96, 1.0
        %98 = vst [vmem:[#allocation5] sm:$0xff] %v97
        // Predicated region
        $region29: #{tpu_custom_call.1} parent=23 // pred_check
          %p99 = pneg %p48
        $region30: #{tpu_custom_call.1} parent=23 // pred_check_branch
          %101 = sbr.rel (%p99) target = $region32
        $region31: #{tpu_custom_call.1} parent=23 // pred_region
          %s103 = ssub.s32 128, 128
          %104 = vsyncadd [#allocation4], %s103
          %s106 = sshll.u32 [#allocation5], 4
          %s107 = int_to_ptr.vmem [resolvable:$true] %s106
          %109 = dma.vmem_to_hbm [thread:$0]  %s107, 128, %s1, [#allocation4]
        $region32: #{tpu_custom_call.1} parent=23 // pred_fallthru
          _
        // Predicated region
        $region33: #{tpu_custom_call.1} parent=23 // pred_check
          %p110 = pneg %p48
        $region34: #{tpu_custom_call.1} parent=23 // pred_check_branch
          %112 = sbr.rel (%p110) target = $region36
        $region35: #{tpu_custom_call.1} parent=23 // pred_region
          %113 = dma.done [#allocation4], 128
        $region36: #{tpu_custom_call.1} parent=23 // pred_fallthru
          _
      $region24: #{tpu_custom_call.1} parent=5 // pred_fallthru
        _
      %p114 = scmp.le.s32.totalorder 2, %s9
      // Predicated region
      $region37: #{tpu_custom_call.1} parent=5 // pred_check
        %p115 = pneg %p114
      $region38: #{tpu_custom_call.1} parent=5 // pred_check_branch
        %117 = sbr.rel (%p115) target = $region40
      $region39: #{tpu_custom_call.1} parent=5 // pred_region
        %s118 = ssub.s32 %s9, 2
      $region40: #{tpu_custom_call.1} parent=5 // pred_fallthru
        _
    $region6: #{tpu_custom_call.1} parent=1 // loop_footer
      %s13 = sadd.s32 1, %s9
    $region7: #{tpu_custom_call.1} parent=1 // loop_footer_branch
      %8 = sbr.rel target = $region3
    $region8: #{tpu_custom_call.1} parent=1 // loop_exit
      _
    %119 = vsyncpa [#allocation3], 1
    %s120 = scalar_lea.sflag [#allocation3], 1
    %121 = vsyncpa %s120, 1
    %122 = vsyncpa [#allocation4], 1
    %s123 = scalar_lea.sflag [#allocation4], 1
    %124 = vsyncpa %s123, 1

// kernel: _attention_sublayer.1
$region0: #{_attention_sublayer.1}
  #allocation0 [shape = 'u32[]', space=smem, size = 0x4, offset = 0x4, fixed_abs, tag = 'smem constant byte address 0x4 - core index']
  #allocation1 [shape = 'u32[144,128]{1,0:T(1,128)}', space=vmem, size = 0x12000, scoped, tag = 'internal scratch']
  #allocation2 [shape = 'f32[16,256]{1,0:T(8,128)}', space=vmem, size = 0x4000, scoped, tag = 'scratch operand']
  #allocation3 [shape = 's32[1]{0}', space=sflag, size = 0x4, scoped, tag = 'scoped memory for _attention_sublayer.1']
  #allocation4 [shape = 'u8[512]{0}', space=smem, size = 0x200, scoped, tag = 'prefetched SMEM operand 0']
  %s0 = inlined_call_operand.vmem [shape: s32[2], index: 0, kind: input, shape index: {}]
  %s1 = inlined_call_operand.hbm [shape: f32[2,16,256], index: 1, kind: input, shape index: {}]
  %s2 = inlined_call_operand.vmem [shape: f32[1,256], index: 2, kind: input, shape index: {}]
  %s3 = inlined_call_operand.vmem [shape: f32[1,256], index: 3, kind: input, shape index: {}]
  %s4 = inlined_call_operand.hbm [shape: f32[256,768], index: 4, kind: input, shape index: {}]
  %s5 = inlined_call_operand.vmem [shape: f32[1,768], index: 5, kind: input, shape index: {}]
  %s6 = inlined_call_operand.hbm [shape: f32[256,256], index: 6, kind: input, shape index: {}]
  %s7 = inlined_call_operand.vmem [shape: f32[1,256], index: 7, kind: input, shape index: {}]
  %s8 = inlined_call_operand.hbm [shape: f32[2,16,256], index: 8, kind: output, shape index: {}]
  %s9 = sld [smem:[#allocation0]]
  $region73: #{_attention_sublayer.1} parent=0
    _
  %s11 = ssub.s32 1, %s9
  %s12 = scalar_select 0, %s11, %s9
  %s13 = sshll.u32 %s0, 4
  %s14 = int_to_ptr.vmem [resolvable:$true] %s13
  %16 = dma.vmem_to_smem %s14, 16, [#allocation4], [#allocation3]
  %17 = dma.done [#allocation3], 16
  %18 = sfence
  $region1: #{_attention_sublayer.1} parent=0
    #allocation5 [shape = 'u8[32768]{0}', space=vmem, size = 0x8000, scoped, tag = 'input window, operand 1']
    #allocation6 [shape = 's32[2]{0}', space=sflag, size = 0x8, scoped, tag = 'scoped memory for _attention_sublayer.1']
    #allocation7 [shape = 's32[2]{0}', space=sflag, size = 0x8, scoped, tag = 'scoped memory for _attention_sublayer.1']
    #allocation8 [shape = 'u8[786432]{0}', space=vmem, size = 0xc0000, scoped, tag = 'input window, operand 4, single buffered']
    #allocation9 [shape = 's32[1]{0}', space=sflag, size = 0x4, scoped, tag = 'scoped memory for _attention_sublayer.1']
    #allocation10 [shape = 'u8[262144]{0}', space=vmem, size = 0x40000, scoped, tag = 'input window, operand 6, single buffered']
    #allocation11 [shape = 'u8[32768]{0}', space=vmem, size = 0x8000, scoped, tag = 'output window, operand 0']
    %19 = vsyncpa [#allocation6], 0
    %s20 = scalar_lea.sflag [#allocation6], 1
    %21 = vsyncpa %s20, 0
    %22 = vsyncpa [#allocation9], 0
    %23 = vsyncpa [#allocation7], 0
    %s24 = scalar_lea.sflag [#allocation7], 1
    %25 = vsyncpa %s24, 0
    loop: start=0, step=1, limit=4
    $region2: #{_attention_sublayer.1} parent=1 // loop_pre_header
      _
    $region3: #{_attention_sublayer.1} parent=1 // loop_header
      %s27 = sphi 0, %s31
      %p28 = scmp.ge.s32.totalorder %s27, 4
      %s37 = sphi 0, %s39
      %s40 = sphi 0, %s37
      %s41 = sphi 0, %s40
      %s57 = sphi 0, %s41
      %s61 = sphi 0, %s61
      %s63 = sphi 0, %s61
      %s64 = sphi 0, %s63
      %s78 = sphi 0, %s64
      %s82 = sphi 0, %s82
      %s84 = sphi 0, %s82
      %s85 = sphi 0, %s84
      %s99 = sphi 0, %s85
      %s103 = sphi 0, %s103
      %s105 = sphi 0, %s103
      %s106 = sphi 0, %s105
      %s120 = sphi 0, %s106
      %s124 = sphi 0, %s124
      %s126 = sphi 0, %s124
      %s127 = sphi 0, %s126
      %s141 = sphi 0, %s127
      %s145 = sphi 0, %s145
      %s147 = sphi 0, %s145
      %s148 = sphi 0, %s147
      %s162 = sphi 0, %s148
      %s166 = sphi 0, %s166
      %s168 = sphi 0, %s166
      %s169 = sphi 0, %s168
      %s183 = sphi 0, %s169
      %s189 = sphi 0, %s191
      %s192 = sphi 0, %s189
      %s193 = sphi 0, %s192
      %s209 = sphi 0, %s193
    $region4: #{_attention_sublayer.1} parent=1 // loop_header_branch
      %30 = sbr.rel (%p28) target = $region8
    $region5: #{_attention_sublayer.1} parent=1 // loop_body
      %s32 = ssub.s32 %s27, 1
      %s33 = ssub.s32 %s27, 2
      %s34 = sadd.s32 %s27, 1
      %s35 = ssub.s32 %s27, %s34
      %p36 = scmp.eq.s32.totalorder %s35, 0
      %s38 = sadd.s32 %s37, 1
      %s39 = scalar_select %p36, %s37, %s38
      %p42 = pneg %p36
      %p43 = scmp.eq.s32.totalorder %s27, 1
      %p44 = por %p42, %p43
      %p45 = scmp.ne.s32.totalorder %s37, %s40
      %p46 = scmp.eq.s32.totalorder %s27, 0
      %p47 = por %p45, %p46
      %p48 = scmp.ne.s32.totalorder %s37, %s40
      %p49 = scmp.eq.s32.totalorder %s32, 1
      %p50 = por %p48, %p49
      %p51 = scmp.ne.s32.totalorder %s40, %s41
      %p52 = scmp.eq.s32.totalorder %s32, 0
      %p53 = por %p51, %p52
      %p54 = scmp.ne.s32.totalorder %s40, %s41
      %p55 = scmp.eq.s32.totalorder %s33, 1
      %p56 = por %p54, %p55
      %p58 = scmp.ne.s32.totalorder %s41, %s57
      %p59 = scmp.eq.s32.totalorder %s33, 0
      %p60 = por %p58, %p59
      %s62 = sadd.s32 %s61, 1
      %p65 = scmp.eq.s32.totalorder %s27, 1
      %p66 = scmp.ne.s32.totalorder %s61, %s63
      %p67 = scmp.eq.s32.totalorder %s27, 0
      %p68 = por %p66, %p67
      %p69 = scmp.ne.s32.totalorder %s61, %s63
      %p70 = scmp.eq.s32.totalorder %s32, 1
      %p71 = por %p69, %p70
      %p72 = scmp.ne.s32.totalorder %s63, %s64
      %p73 = scmp.eq.s32.totalorder %s32, 0
      %p74 = por %p72, %p73
      %p75 = scmp.ne.s32.totalorder %s63, %s64
      %p76 = scmp.eq.s32.totalorder %s33, 1
      %p77 = por %p75, %p76
      %p79 = scmp.ne.s32.totalorder %s64, %s78
      %p80 = scmp.eq.s32.totalorder %s33, 0
      %p81 = por %p79, %p80
      %s83 = sadd.s32 %s82, 1
      %p86 = scmp.eq.s32.totalorder %s27, 1
      %p87 = scmp.ne.s32.totalorder %s82, %s84
      %p88 = scmp.eq.s32.totalorder %s27, 0
      %p89 = por %p87, %p88
      %p90 = scmp.ne.s32.totalorder %s82, %s84
      %p91 = scmp.eq.s32.totalorder %s32, 1
      %p92 = por %p90, %p91
      %p93 = scmp.ne.s32.totalorder %s84, %s85
      %p94 = scmp.eq.s32.totalorder %s32, 0
      %p95 = por %p93, %p94
      %p96 = scmp.ne.s32.totalorder %s84, %s85
      %p97 = scmp.eq.s32.totalorder %s33, 1
      %p98 = por %p96, %p97
      %p100 = scmp.ne.s32.totalorder %s85, %s99
      %p101 = scmp.eq.s32.totalorder %s33, 0
      %p102 = por %p100, %p101
      %s104 = sadd.s32 %s103, 1
      %p107 = scmp.eq.s32.totalorder %s27, 1
      %p108 = scmp.ne.s32.totalorder %s103, %s105
      %p109 = scmp.eq.s32.totalorder %s27, 0
      %p110 = por %p108, %p109
      %p111 = scmp.ne.s32.totalorder %s103, %s105
      %p112 = scmp.eq.s32.totalorder %s32, 1
      %p113 = por %p111, %p112
      %p114 = scmp.ne.s32.totalorder %s105, %s106
      %p115 = scmp.eq.s32.totalorder %s32, 0
      %p116 = por %p114, %p115
      %p117 = scmp.ne.s32.totalorder %s105, %s106
      %p118 = scmp.eq.s32.totalorder %s33, 1
      %p119 = por %p117, %p118
      %p121 = scmp.ne.s32.totalorder %s106, %s120
      %p122 = scmp.eq.s32.totalorder %s33, 0
      %p123 = por %p121, %p122
      %s125 = sadd.s32 %s124, 1
      %p128 = scmp.eq.s32.totalorder %s27, 1
      %p129 = scmp.ne.s32.totalorder %s124, %s126
      %p130 = scmp.eq.s32.totalorder %s27, 0
      %p131 = por %p129, %p130
      %p132 = scmp.ne.s32.totalorder %s124, %s126
      %p133 = scmp.eq.s32.totalorder %s32, 1
      %p134 = por %p132, %p133
      %p135 = scmp.ne.s32.totalorder %s126, %s127
      %p136 = scmp.eq.s32.totalorder %s32, 0
      %p137 = por %p135, %p136
      %p138 = scmp.ne.s32.totalorder %s126, %s127
      %p139 = scmp.eq.s32.totalorder %s33, 1
      %p140 = por %p138, %p139
      %p142 = scmp.ne.s32.totalorder %s127, %s141
      %p143 = scmp.eq.s32.totalorder %s33, 0
      %p144 = por %p142, %p143
      %s146 = sadd.s32 %s145, 1
      %p149 = scmp.eq.s32.totalorder %s27, 1
      %p150 = scmp.ne.s32.totalorder %s145, %s147
      %p151 = scmp.eq.s32.totalorder %s27, 0
      %p152 = por %p150, %p151
      %p153 = scmp.ne.s32.totalorder %s145, %s147
      %p154 = scmp.eq.s32.totalorder %s32, 1
      %p155 = por %p153, %p154
      %p156 = scmp.ne.s32.totalorder %s147, %s148
      %p157 = scmp.eq.s32.totalorder %s32, 0
      %p158 = por %p156, %p157
      %p159 = scmp.ne.s32.totalorder %s147, %s148
      %p160 = scmp.eq.s32.totalorder %s33, 1
      %p161 = por %p159, %p160
      %p163 = scmp.ne.s32.totalorder %s148, %s162
      %p164 = scmp.eq.s32.totalorder %s33, 0
      %p165 = por %p163, %p164
      %s167 = sadd.s32 %s166, 1
      %p170 = scmp.eq.s32.totalorder %s27, 1
      %p171 = scmp.ne.s32.totalorder %s166, %s168
      %p172 = scmp.eq.s32.totalorder %s27, 0
      %p173 = por %p171, %p172
      %p174 = scmp.ne.s32.totalorder %s166, %s168
      %p175 = scmp.eq.s32.totalorder %s32, 1
      %p176 = por %p174, %p175
      %p177 = scmp.ne.s32.totalorder %s168, %s169
      %p178 = scmp.eq.s32.totalorder %s32, 0
      %p179 = por %p177, %p178
      %p180 = scmp.ne.s32.totalorder %s168, %s169
      %p181 = scmp.eq.s32.totalorder %s33, 1
      %p182 = por %p180, %p181
      %p184 = scmp.ne.s32.totalorder %s169, %s183
      %p185 = scmp.eq.s32.totalorder %s33, 0
      %p186 = por %p184, %p185
      %s187 = ssub.s32 %s27, %s34
      %p188 = scmp.eq.s32.totalorder %s187, 0
      %s190 = sadd.s32 %s189, 1
      %s191 = scalar_select %p188, %s189, %s190
      %p194 = pneg %p188
      %p195 = scmp.eq.s32.totalorder %s27, 1
      %p196 = por %p194, %p195
      %p197 = scmp.ne.s32.totalorder %s189, %s192
      %p198 = scmp.eq.s32.totalorder %s27, 0
      %p199 = por %p197, %p198
      %p200 = scmp.ne.s32.totalorder %s189, %s192
      %p201 = scmp.eq.s32.totalorder %s32, 1
      %p202 = por %p200, %p201
      %p203 = scmp.ne.s32.totalorder %s192, %s193
      %p204 = scmp.eq.s32.totalorder %s32, 0
      %p205 = por %p203, %p204
      %p206 = scmp.ne.s32.totalorder %s192, %s193
      %p207 = scmp.eq.s32.totalorder %s33, 1
      %p208 = por %p206, %p207
      %p210 = scmp.ne.s32.totalorder %s193, %s209
      %p211 = scmp.eq.s32.totalorder %s33, 0
      %p212 = por %p210, %p211
      %p213 = scmp.le.s32.totalorder 1, %s27
      %p214 = scmp.lt.s32.totalorder %s27, 3
      %p215 = pnand %p213, %p214
      %p216 = pneg %p215
      // Predicated region
      $region9: #{_attention_sublayer.1} parent=5 // pred_check
        _
      $region10: #{_attention_sublayer.1} parent=5 // pred_check_branch
        %218 = sbr.rel (%p215) target = $region12
      $region11: #{_attention_sublayer.1} parent=5 // pred_region
        %s219 = ssub.s32 %s27, 1
        // Predicated region
        $region13: #{_attention_sublayer.1} parent=11 // pred_check
          %p220 = pneg %p74
        $region14: #{_attention_sublayer.1} parent=11 // pred_check_branch
          %222 = sbr.rel (%p220) target = $region16
        $region15: #{_attention_sublayer.1} parent=11 // pred_region
          _
        $region16: #{_attention_sublayer.1} parent=11 // pred_fallthru
          _
        // Predicated region
        $region17: #{_attention_sublayer.1} parent=11 // pred_check
          %p223 = pneg %p95
        $region18: #{_attention_sublayer.1} parent=11 // pred_check_branch
          %225 = sbr.rel (%p223) target = $region20
        $region19: #{_attention_sublayer.1} parent=11 // pred_region
          _
        $region20: #{_attention_sublayer.1} parent=11 // pred_fallthru
          _
        // Predicated region
        $region21: #{_attention_sublayer.1} parent=11 // pred_check
          %p226 = pneg %p116
        $region22: #{_attention_sublayer.1} parent=11 // pred_check_branch
          %228 = sbr.rel (%p226) target = $region24
        $region23: #{_attention_sublayer.1} parent=11 // pred_region
          %s230 = ssub.s32 24576, 24576
          %231 = vsyncadd [#allocation9], %s230
          %s232 = sshll.u32 [#allocation8], 4
          %s233 = int_to_ptr.vmem [resolvable:$true] %s232
          %238 = dma.hbm_to_vmem [thread:$0]  %s4, 24576, %s233, [#allocation9], 768, 768, 48
        $region24: #{_attention_sublayer.1} parent=11 // pred_fallthru
          _
        // Predicated region
        $region25: #{_attention_sublayer.1} parent=11 // pred_check
          %p239 = pneg %p137
        $region26: #{_attention_sublayer.1} parent=11 // pred_check_branch
          %241 = sbr.rel (%p239) target = $region28
        $region27: #{_attention_sublayer.1} parent=11 // pred_region
          _
        $region28: #{_attention_sublayer.1} parent=11 // pred_fallthru
          _
        // Predicated region
        $region29: #{_attention_sublayer.1} parent=11 // pred_check
          %p242 = pneg %p158
        $region30: #{_attention_sublayer.1} parent=11 // pred_check_branch
          %244 = sbr.rel (%p242) target = $region32
        $region31: #{_attention_sublayer.1} parent=11 // pred_region
          %s246 = ssub.s32 8192, 8192
          %247 = vsyncadd [#allocation9], %s246
          %s248 = sshll.u32 [#allocation10], 4
          %s249 = int_to_ptr.vmem [resolvable:$true] %s248
          %254 = dma.hbm_to_vmem [thread:$0]  %s6, 8192, %s249, [#allocation9], 256, 256, 16
        $region32: #{_attention_sublayer.1} parent=11 // pred_fallthru
          _
        // Predicated region
        $region33: #{_attention_sublayer.1} parent=11 // pred_check
          %p255 = pneg %p179
        $region34: #{_attention_sublayer.1} parent=11 // pred_check_branch
          %257 = sbr.rel (%p255) target = $region36
        $region35: #{_attention_sublayer.1} parent=11 // pred_region
          _
        $region36: #{_attention_sublayer.1} parent=11 // pred_fallthru
          _
      $region12: #{_attention_sublayer.1} parent=5 // pred_fallthru
        _
      %p258 = scmp.lt.s32.totalorder %s27, 2
      // Predicated region
      $region37: #{_attention_sublayer.1} parent=5 // pred_check
        %p259 = pneg %p258
      $region38: #{_attention_sublayer.1} parent=5 // pred_check_branch
        %261 = sbr.rel (%p259) target = $region40
      $region39: #{_attention_sublayer.1} parent=5 // pred_region
        // Predicated region
        $region41: #{_attention_sublayer.1} parent=39 // pred_check
          %p262 = pneg %p47
        $region42: #{_attention_sublayer.1} parent=39 // pred_check_branch
          %264 = sbr.rel (%p262) target = $region44
        $region43: #{_attention_sublayer.1} parent=39 // pred_region
          %s265 = sand.u32 %s37, 1
          %s266 = scalar_lea.sflag [#allocation6], %s265
          %s267 = sand.u32 %s37, 1
          %s268 = smul.addr %s267, 32
          %s269 = scalar_lea.vmem [#allocation5], %s268
          %s271 = ssub.s32 512, 512
          %272 = vsyncadd %s266, %s271
          %s273 = smul.addr %s27, 4
          %s274 = smul.addr %s273, 128
          %s275 = scalar_lea.hbm %s1, %s274
          %s276 = sshll.u32 %s269, 4
          %s277 = int_to_ptr.vmem [resolvable:$true] %s276
          %282 = dma.hbm_to_vmem [thread:$0]  %s275, 512, %s277, %s266, 256, 256, 16
        $region44: #{_attention_sublayer.1} parent=39 // pred_fallthru
          _
      $region40: #{_attention_sublayer.1} parent=5 // pred_fallthru
        _
      %p283 = scmp.le.s32.totalorder 1, %s27
      %p284 = scmp.lt.s32.totalorder %s27, 3
      %p285 = pnand %p283, %p284
      %p286 = pneg %p285
      // Predicated region
      $region45: #{_attention_sublayer.1} parent=5 // pred_check
        _
      $region46: #{_attention_sublayer.1} parent=5 // pred_check_branch
        %288 = sbr.rel (%p285) target = $region48
      $region47: #{_attention_sublayer.1} parent=5 // pred_region
        %s289 = ssub.s32 %s27, 1
        %s290 = sand.u32 %s40, 1
        %s291 = scalar_lea.sflag [#allocation6], %s290
        %s292 = sand.u32 %s40, 1
        %s293 = smul.addr %s292, 32
        %s294 = scalar_lea.vmem [#allocation5], %s293
        // Predicated region
        $region49: #{_attention_sublayer.1} parent=47 // pred_check
          %p295 = pneg %p53
        $region50: #{_attention_sublayer.1} parent=47 // pred_check_branch
          %297 = sbr.rel (%p295) target = $region52
        $region51: #{_attention_sublayer.1} parent=47 // pred_region
          %298 = dma.done %s291, 512
        $region52: #{_attention_sublayer.1} parent=47 // pred_fallthru
          _
        // Predicated region
        $region53: #{_attention_sublayer.1} parent=47 // pred_check
          %p299 = pneg %p116
        $region54: #{_attention_sublayer.1} parent=47 // pred_check_branch
          %301 = sbr.rel (%p299) target = $region56
        $region55: #{_attention_sublayer.1} parent=47 // pred_region
          %302 = dma.done [#allocation9], 24576
        $region56: #{_attention_sublayer.1} parent=47 // pred_fallthru
          _
        // Predicated region
        $region57: #{_attention_sublayer.1} parent=47 // pred_check
          %p303 = pneg %p158
        $region58: #{_attention_sublayer.1} parent=47 // pred_check_branch
          %305 = sbr.rel (%p303) target = $region60
        $region59: #{_attention_sublayer.1} parent=47 // pred_region
          %306 = dma.done [#allocation9], 8192
        $region60: #{_attention_sublayer.1} parent=47 // pred_fallthru
          _
        %s307 = sand.u32 %s40, 1
        %s308 = scalar_lea.sflag [#allocation6], %s307
        %s309 = sand.u32 %s40, 1
        %s310 = smul.addr %s309, 32
        %s311 = scalar_lea.vmem [#allocation5], %s310
        %p312 = pneg %p53
        %p313 = pneg %p50
        %p314 = pneg %p74
        %p315 = pneg %p71
        %p316 = pneg %p95
        %p317 = pneg %p92
        %p318 = pneg %p116
        %p319 = pneg %p113
        %p320 = pneg %p137
        %p321 = pneg %p134
        %p322 = pneg %p158
        %p323 = pneg %p155
        %p324 = pneg %p179
        %p325 = pneg %p176
        %p326 = pneg %p205
        %p327 = pneg %p202
        %s328 = sand.u32 %s192, 1
        %s329 = scalar_lea.sflag [#allocation7], %s328
        %s330 = sand.u32 %s192, 1
        %s331 = smul.addr %s330, 32
        %s332 = scalar_lea.vmem [#allocation11], %s331
        %v333 = vld [vmem:[%s294] sm:$0xff]
        %v334 = vld [vmem:[%s294 + $0x8] sm:$0xff]
        %v335 = vld [vmem:[%s294 + $0x10] sm:$0xff]
        %v336 = vld [vmem:[%s294 + $0x18] sm:$0xff]
        %v337 = vld [vmem:[%s2] sm:$0x3]
        %v338 = vld [vmem:[%s3] sm:$0x3]
        %v339 = vadd.f32 %v333, %v334
        %340 = vadd.xlane.f32.xlu0 %v339
        %v341 = vpop.xlane.xlu0 %340
        %v342 = vadd.f32 %v335, %v336
        %343 = vadd.xlane.f32.xlu0 %v342
        %v344 = vpop.xlane.xlu0 %343
        %v345 = vrcp.pop 256.0
        %v346 = vmul.f32 %v341, %v345
        %v347 = vmul.f32 %v344, %v345
        %v348 = vsub.f32 %v333, %v346
        %v349 = vsub.f32 %v334, %v346
        %v350 = vsub.f32 %v335, %v347
        %v351 = vsub.f32 %v336, %v347
        %v352 = vmul.f32 %v348, %v348
        %v353 = vmul.f32 %v349, %v349
        %v354 = vmul.f32 %v350, %v350
        %v355 = vmul.f32 %v351, %v351
        %v356 = vadd.f32 %v352, %v353
        %357 = vadd.xlane.f32.xlu0 %v356
        %v358 = vpop.xlane.xlu0 %357
        %v359 = vadd.f32 %v354, %v355
        %360 = vadd.xlane.f32.xlu0 %v359
        %v361 = vpop.xlane.xlu0 %360
        %v362 = vrcp.pop 255.0
        %v363 = vmul.f32 %v358, %v362
        %v364 = vmul.f32 %v361, %v362
        %v366 = vlaneseq
        %v367 = vshrl.u32 %v366, 7
        %v368 = vsub.s32 0, %v367
        %v369 = vrot.slane %v337, %v368
        %v370 = vlaneseq
        %v371 = vshrl.u32 %v370, 7
        %v372 = vsub.s32 1, %v371
        %v373 = vrot.slane %v337, %v372
        %v376 = vmul.f32 %v369, %v348
        %v377 = vmul.f32 %v373, %v349
        %v378 = vmul.f32 %v369, %v350
        %v379 = vmul.f32 %v373, %v351
        %v380 = vrsqrt.pop %v363
        %v381 = vmul.f32 %v363, %v380
        %vm382 = vcmp.eq.f32.partialorder %v363, inf
        %v383 = vsel %vm382, %v363, %v381
        %vm384 = vcmp.eq.f32.partialorder %v363, 0.0
        %v385 = vand.u32 %v363, 2147483648
        %v386 = vsel %vm384, %v385, %v383
        %v387 = vrsqrt.pop %v364
        %v388 = vmul.f32 %v364, %v387
        %vm389 = vcmp.eq.f32.partialorder %v364, inf
        %v390 = vsel %vm389, %v364, %v388
        %vm391 = vcmp.eq.f32.partialorder %v364, 0.0
        %v392 = vand.u32 %v364, 2147483648
        %v393 = vsel %vm391, %v392, %v390
        %v394 = vadd.f32 %v386, 1e-06
        %v395 = vadd.f32 %v393, 1e-06
        %v396 = vrcp.pop %v394
        %v397 = vmul.f32 %v376, %v396
        %v398 = vmul.f32 %v377, %v396
        %v399 = vrcp.pop %v395
        %v400 = vmul.f32 %v378, %v399
        %v401 = vmul.f32 %v379, %v399
        %v403 = vlaneseq
        %v404 = vshrl.u32 %v403, 7
        %v405 = vsub.s32 0, %v404
        %v406 = vrot.slane %v338, %v405
        %v407 = vlaneseq
        %v408 = vshrl.u32 %v407, 7
        %v409 = vsub.s32 1, %v408
        %v410 = vrot.slane %v338, %v409
        %v413 = vadd.f32 %v397, %v406
        %v414 = vadd.f32 %v398, %v410
        %v415 = vadd.f32 %v400, %v406
        %v416 = vadd.f32 %v401, %v410
        %v417 = vld [vmem:[#allocation8] sm:$0xff]
        %v418 = vld [vmem:[#allocation8 + $0x8] sm:$0xff]
        %v419 = vld [vmem:[#allocation8 + $0x10] sm:$0xff]
        %v420 = vld [vmem:[#allocation8 + $0x18] sm:$0xff]
        %v421 = vld [vmem:[#allocation8 + $0x20] sm:$0xff]
        %v422 = vld [vmem:[#allocation8 + $0x28] sm:$0xff]
        %v423 = vld [vmem:[#allocation8 + $0x30] sm:$0xff]
        %v424 = vld [vmem:[#allocation8 + $0x38] sm:$0xff]
        %v425 = vld [vmem:[#allocation8 + $0x40] sm:$0xff]
        %v426 = vld [vmem:[#allocation8 + $0x48] sm:$0xff]
        %v427 = vld [vmem:[#allocation8 + $0x50] sm:$0xff]
        %v428 = vld [vmem:[#allocation8 + $0x58] sm:$0xff]
        %v429 = vld [vmem:[#allocation8 + $0x60] sm:$0xff]
        %v430 = vld [vmem:[#allocation8 + $0x68] sm:$0xff]
        %v431 = vld [vmem:[#allocation8 + $0x70] sm:$0xff]
        %v432 = vld [vmem:[#allocation8 + $0x78] sm:$0xff]
        %v433 = vld [vmem:[#allocation8 + $0x80] sm:$0xff]
        %v434 = vld [vmem:[#allocation8 + $0x88] sm:$0xff]
        %v435 = vld [vmem:[#allocation8 + $0x90] sm:$0xff]
        %v436 = vld [vmem:[#allocation8 + $0x98] sm:$0xff]
        %v437 = vld [vmem:[#allocation8 + $0xa0] sm:$0xff]
        %v438 = vld [vmem:[#allocation8 + $0xa8] sm:$0xff]
        %v439 = vld [vmem:[#allocation8 + $0xb0] sm:$0xff]
        %v440 = vld [vmem:[#allocation8 + $0xb8] sm:$0xff]
        %v441 = vld [vmem:[#allocation8 + $0xc0] sm:$0xff]
        %v442 = vld [vmem:[#allocation8 + $0xc8] sm:$0xff]
        %v443 = vld [vmem:[#allocation8 + $0xd0] sm:$0xff]
        %v444 = vld [vmem:[#allocation8 + $0xd8] sm:$0xff]
        %v445 = vld [vmem:[#allocation8 + $0xe0] sm:$0xff]
        %v446 = vld [vmem:[#allocation8 + $0xe8] sm:$0xff]
        %v447 = vld [vmem:[#allocation8 + $0xf0] sm:$0xff]
        %v448 = vld [vmem:[#allocation8 + $0xf8] sm:$0xff]
        %v449 = vld [vmem:[#allocation8 + $0x100] sm:$0xff]
        %v450 = vld [vmem:[#allocation8 + $0x108] sm:$0xff]
        %v451 = vld [vmem:[#allocation8 + $0x110] sm:$0xff]
        %v452 = vld [vmem:[#allocation8 + $0x118] sm:$0xff]
        %v453 = vld [vmem:[#allocation8 + $0x120] sm:$0xff]
        %v454 = vld [vmem:[#allocation8 + $0x128] sm:$0xff]
        %v455 = vld [vmem:[#allocation8 + $0x130] sm:$0xff]
        %v456 = vld [vmem:[#allocation8 + $0x138] sm:$0xff]
        %v457 = vld [vmem:[#allocation8 + $0x140] sm:$0xff]
        %v458 = vld [vmem:[#allocation8 + $0x148] sm:$0xff]
        %v459 = vld [vmem:[#allocation8 + $0x150] sm:$0xff]
        %v460 = vld [vmem:[#allocation8 + $0x158] sm:$0xff]
        %v461 = vld [vmem:[#allocation8 + $0x160] sm:$0xff]
        %v462 = vld [vmem:[#allocation8 + $0x168] sm:$0xff]
        %v463 = vld [vmem:[#allocation8 + $0x170] sm:$0xff]
        %v464 = vld [vmem:[#allocation8 + $0x178] sm:$0xff]
        %v465 = vld [vmem:[#allocation8 + $0x180] sm:$0xff]
        %v466 = vld [vmem:[#allocation8 + $0x188] sm:$0xff]
        %v467 = vld [vmem:[#allocation8 + $0x190] sm:$0xff]
        %v468 = vld [vmem:[#allocation8 + $0x198] sm:$0xff]
        %v469 = vld [vmem:[#allocation8 + $0x1a0] sm:$0xff]
        %v470 = vld [vmem:[#allocation8 + $0x1a8] sm:$0xff]
        %v471 = vld [vmem:[#allocation8 + $0x1b0] sm:$0xff]
        %v472 = vld [vmem:[#allocation8 + $0x1b8] sm:$0xff]
        %v473 = vld [vmem:[#allocation8 + $0x1c0] sm:$0xff]
        %v474 = vld [vmem:[#allocation8 + $0x1c8] sm:$0xff]
        %v475 = vld [vmem:[#allocation8 + $0x1d0] sm:$0xff]
        %v476 = vld [vmem:[#allocation8 + $0x1d8] sm:$0xff]
        %v477 = vld [vmem:[#allocation8 + $0x1e0] sm:$0xff]
        %v478 = vld [vmem:[#allocation8 + $0x1e8] sm:$0xff]
        %v479 = vld [vmem:[#allocation8 + $0x1f0] sm:$0xff]
        %v480 = vld [vmem:[#allocation8 + $0x1f8] sm:$0xff]
        %v481 = vld [vmem:[#allocation8 + $0x200] sm:$0xff]
        %v482 = vld [vmem:[#allocation8 + $0x208] sm:$0xff]
        %v483 = vld [vmem:[#allocation8 + $0x210] sm:$0xff]
        %v484 = vld [vmem:[#allocation8 + $0x218] sm:$0xff]
        %v485 = vld [vmem:[#allocation8 + $0x220] sm:$0xff]
        %v486 = vld [vmem:[#allocation8 + $0x228] sm:$0xff]
        %v487 = vld [vmem:[#allocation8 + $0x230] sm:$0xff]
        %v488 = vld [vmem:[#allocation8 + $0x238] sm:$0xff]
        %v489 = vld [vmem:[#allocation8 + $0x240] sm:$0xff]
        %v490 = vld [vmem:[#allocation8 + $0x248] sm:$0xff]
        %v491 = vld [vmem:[#allocation8 + $0x250] sm:$0xff]
        %v492 = vld [vmem:[#allocation8 + $0x258] sm:$0xff]
        %v493 = vld [vmem:[#allocation8 + $0x260] sm:$0xff]
        %v494 = vld [vmem:[#allocation8 + $0x268] sm:$0xff]
        %v495 = vld [vmem:[#allocation8 + $0x270] sm:$0xff]
        %v496 = vld [vmem:[#allocation8 + $0x278] sm:$0xff]
        %v497 = vld [vmem:[#allocation8 + $0x280] sm:$0xff]
        %v498 = vld [vmem:[#allocation8 + $0x288] sm:$0xff]
        %v499 = vld [vmem:[#allocation8 + $0x290] sm:$0xff]
        %v500 = vld [vmem:[#allocation8 + $0x298] sm:$0xff]
        %v501 = vld [vmem:[#allocation8 + $0x2a0] sm:$0xff]
        %v502 = vld [vmem:[#allocation8 + $0x2a8] sm:$0xff]
        %v503 = vld [vmem:[#allocation8 + $0x2b0] sm:$0xff]
        %v504 = vld [vmem:[#allocation8 + $0x2b8] sm:$0xff]
        %v505 = vld [vmem:[#allocation8 + $0x2c0] sm:$0xff]
        %v506 = vld [vmem:[#allocation8 + $0x2c8] sm:$0xff]
        %v507 = vld [vmem:[#allocation8 + $0x2d0] sm:$0xff]
        %v508 = vld [vmem:[#allocation8 + $0x2d8] sm:$0xff]
        %v509 = vld [vmem:[#allocation8 + $0x2e0] sm:$0xff]
        %v510 = vld [vmem:[#allocation8 + $0x2e8] sm:$0xff]
        %v511 = vld [vmem:[#allocation8 + $0x2f0] sm:$0xff]
        %v512 = vld [vmem:[#allocation8 + $0x2f8] sm:$0xff]
        %v513 = vld [vmem:[#allocation8 + $0x300] sm:$0xff]
        %v514 = vld [vmem:[#allocation8 + $0x308] sm:$0xff]
        %v515 = vld [vmem:[#allocation8 + $0x310] sm:$0xff]
        %v516 = vld [vmem:[#allocation8 + $0x318] sm:$0xff]
        %v517 = vld [vmem:[#allocation8 + $0x320] sm:$0xff]
        %v518 = vld [vmem:[#allocation8 + $0x328] sm:$0xff]
        %v519 = vld [vmem:[#allocation8 + $0x330] sm:$0xff]
        %v520 = vld [vmem:[#allocation8 + $0x338] sm:$0xff]
        %v521 = vld [vmem:[#allocation8 + $0x340] sm:$0xff]
        %v522 = vld [vmem:[#allocation8 + $0x348] sm:$0xff]
        %v523 = vld [vmem:[#allocation8 + $0x350] sm:$0xff]
        %v524 = vld [vmem:[#allocation8 + $0x358] sm:$0xff]
        %v525 = vld [vmem:[#allocation8 + $0x360] sm:$0xff]
        %v526 = vld [vmem:[#allocation8 + $0x368] sm:$0xff]
        %v527 = vld [vmem:[#allocation8 + $0x370] sm:$0xff]
        %v528 = vld [vmem:[#allocation8 + $0x378] sm:$0xff]
        %v529 = vld [vmem:[#allocation8 + $0x380] sm:$0xff]
        %v530 = vld [vmem:[#allocation8 + $0x388] sm:$0xff]
        %v531 = vld [vmem:[#allocation8 + $0x390] sm:$0xff]
        %v532 = vld [vmem:[#allocation8 + $0x398] sm:$0xff]
        %v533 = vld [vmem:[#allocation8 + $0x3a0] sm:$0xff]
        %v534 = vld [vmem:[#allocation8 + $0x3a8] sm:$0xff]
        %v535 = vld [vmem:[#allocation8 + $0x3b0] sm:$0xff]
        %v536 = vld [vmem:[#allocation8 + $0x3b8] sm:$0xff]
        %v537 = vld [vmem:[#allocation8 + $0x3c0] sm:$0xff]
        %v538 = vld [vmem:[#allocation8 + $0x3c8] sm:$0xff]
        %v539 = vld [vmem:[#allocation8 + $0x3d0] sm:$0xff]
        %v540 = vld [vmem:[#allocation8 + $0x3d8] sm:$0xff]
        %v541 = vld [vmem:[#allocation8 + $0x3e0] sm:$0xff]
        %v542 = vld [vmem:[#allocation8 + $0x3e8] sm:$0xff]
        %v543 = vld [vmem:[#allocation8 + $0x3f0] sm:$0xff]
        %v544 = vld [vmem:[#allocation8 + $0x3f8] sm:$0xff]
        %v545 = vld [vmem:[#allocation8 + $0x400] sm:$0xff]
        %v546 = vld [vmem:[#allocation8 + $0x408] sm:$0xff]
        %v547 = vld [vmem:[#allocation8 + $0x410] sm:$0xff]
        %v548 = vld [vmem:[#allocation8 + $0x418] sm:$0xff]
        %v549 = vld [vmem:[#allocation8 + $0x420] sm:$0xff]
        %v550 = vld [vmem:[#allocation8 + $0x428] sm:$0xff]
        %v551 = vld [vmem:[#allocation8 + $0x430] sm:$0xff]
        %v552 = vld [vmem:[#allocation8 + $0x438] sm:$0xff]
        %v553 = vld [vmem:[#allocation8 + $0x440] sm:$0xff]
        %v554 = vld [vmem:[#allocation8 + $0x448] sm:$0xff]
        %v555 = vld [vmem:[#allocation8 + $0x450] sm:$0xff]
        %v556 = vld [vmem:[#allocation8 + $0x458] sm:$0xff]
        %v557 = vld [vmem:[#allocation8 + $0x460] sm:$0xff]
        %v558 = vld [vmem:[#allocation8 + $0x468] sm:$0xff]
        %v559 = vld [vmem:[#allocation8 + $0x470] sm:$0xff]
        %v560 = vld [vmem:[#allocation8 + $0x478] sm:$0xff]
        %v561 = vld [vmem:[#allocation8 + $0x480] sm:$0xff]
        %v562 = vld [vmem:[#allocation8 + $0x488] sm:$0xff]
        %v563 = vld [vmem:[#allocation8 + $0x490] sm:$0xff]
        %v564 = vld [vmem:[#allocation8 + $0x498] sm:$0xff]
        %v565 = vld [vmem:[#allocation8 + $0x4a0] sm:$0xff]
        %v566 = vld [vmem:[#allocation8 + $0x4a8] sm:$0xff]
        %v567 = vld [vmem:[#allocation8 + $0x4b0] sm:$0xff]
        %v568 = vld [vmem:[#allocation8 + $0x4b8] sm:$0xff]
        %v569 = vld [vmem:[#allocation8 + $0x4c0] sm:$0xff]
        %v570 = vld [vmem:[#allocation8 + $0x4c8] sm:$0xff]
        %v571 = vld [vmem:[#allocation8 + $0x4d0] sm:$0xff]
        %v572 = vld [vmem:[#allocation8 + $0x4d8] sm:$0xff]
        %v573 = vld [vmem:[#allocation8 + $0x4e0] sm:$0xff]
        %v574 = vld [vmem:[#allocation8 + $0x4e8] sm:$0xff]
        %v575 = vld [vmem:[#allocation8 + $0x4f0] sm:$0xff]
        %v576 = vld [vmem:[#allocation8 + $0x4f8] sm:$0xff]
        %v577 = vld [vmem:[#allocation8 + $0x500] sm:$0xff]
        %v578 = vld [vmem:[#allocation8 + $0x508] sm:$0xff]
        %v579 = vld [vmem:[#allocation8 + $0x510] sm:$0xff]
        %v580 = vld [vmem:[#allocation8 + $0x518] sm:$0xff]
        %v581 = vld [vmem:[#allocation8 + $0x520] sm:$0xff]
        %v582 = vld [vmem:[#allocation8 + $0x528] sm:$0xff]
        %v583 = vld [vmem:[#allocation8 + $0x530] sm:$0xff]
        %v584 = vld [vmem:[#allocation8 + $0x538] sm:$0xff]
        %v585 = vld [vmem:[#allocation8 + $0x540] sm:$0xff]
        %v586 = vld [vmem:[#allocation8 + $0x548] sm:$0xff]
        %v587 = vld [vmem:[#allocation8 + $0x550] sm:$0xff]
        %v588 = vld [vmem:[#allocation8 + $0x558] sm:$0xff]
        %v589 = vld [vmem:[#allocation8 + $0x560] sm:$0xff]
        %v590 = vld [vmem:[#allocation8 + $0x568] sm:$0xff]
        %v591 = vld [vmem:[#allocation8 + $0x570] sm:$0xff]
        %v592 = vld [vmem:[#allocation8 + $0x578] sm:$0xff]
        %v593 = vld [vmem:[#allocation8 + $0x580] sm:$0xff]
        %v594 = vld [vmem:[#allocation8 + $0x588] sm:$0xff]
        %v595 = vld [vmem:[#allocation8 + $0x590] sm:$0xff]
        %v596 = vld [vmem:[#allocation8 + $0x598] sm:$0xff]
        %v597 = vld [vmem:[#allocation8 + $0x5a0] sm:$0xff]
        %v598 = vld [vmem:[#allocation8 + $0x5a8] sm:$0xff]
        %v599 = vld [vmem:[#allocation8 + $0x5b0] sm:$0xff]
        %v600 = vld [vmem:[#allocation8 + $0x5b8] sm:$0xff]
        %v601 = vld [vmem:[#allocation8 + $0x5c0] sm:$0xff]
        %v602 = vld [vmem:[#allocation8 + $0x5c8] sm:$0xff]
        %v603 = vld [vmem:[#allocation8 + $0x5d0] sm:$0xff]
        %v604 = vld [vmem:[#allocation8 + $0x5d8] sm:$0xff]
        %v605 = vld [vmem:[#allocation8 + $0x5e0] sm:$0xff]
        %v606 = vld [vmem:[#allocation8 + $0x5e8] sm:$0xff]
        %v607 = vld [vmem:[#allocation8 + $0x5f0] sm:$0xff]
        %v608 = vld [vmem:[#allocation8 + $0x5f8] sm:$0xff]
        %v609 = vld [vmem:[%s5] sm:$0x3f]
        %v611 = vlaneseq
        %v612 = vshrl.u32 %v611, 7
        %v613 = vsub.s32 0, %v612
        %v614 = vrot.slane %v609, %v613
        %v615 = vlaneseq
        %v616 = vshrl.u32 %v615, 7
        %v617 = vsub.s32 1, %v616
        %v618 = vrot.slane %v609, %v617
        %v619 = vlaneseq
        %v620 = vshrl.u32 %v619, 7
        %v621 = vsub.s32 2, %v620
        %v622 = vrot.slane %v609, %v621
        %v623 = vlaneseq
        %v624 = vshrl.u32 %v623, 7
        %v625 = vsub.s32 3, %v624
        %v626 = vrot.slane %v609, %v625
        %v627 = vlaneseq
        %v628 = vshrl.u32 %v627, 7
        %v629 = vsub.s32 4, %v628
        %v630 = vrot.slane %v609, %v629
        %v631 = vlaneseq
        %v632 = vshrl.u32 %v631, 7
        %v633 = vsub.s32 5, %v632
        %v634 = vrot.slane %v609, %v633
        %641 = vmatprep.subr.mxu0 %v418
        %642 = vmatpush1.msra.mxu0 %v417
        %643 = vmatprep.subr.mxu0 %v424
        %644 = vmatpush1.msra.mxu0 %v423
        %645 = vmatprep.subr.mxu0 %v430
        %646 = vmatpush1.msra.mxu0 %v429
        %647 = vmatprep.subr.mxu0 %v436
        %648 = vmatpush1.msra.mxu0 %v435
        %649 = vmatprep.subr.mxu0 %v442
        %650 = vmatpush1.msra.mxu0 %v441
        %651 = vmatprep.subr.mxu0 %v448
        %652 = vmatpush1.msra.mxu0 %v447
        %653 = vmatprep.subr.mxu0 %v454
        %654 = vmatpush1.msra.mxu0 %v453
        %655 = vmatprep.subr.mxu0 %v460
        %656 = vmatpush1.msra.mxu0 %v459
        %657 = vmatprep.subr.mxu0 %v466
        %658 = vmatpush1.msra.mxu0 %v465
        %659 = vmatprep.subr.mxu0 %v472
        %660 = vmatpush1.msra.mxu0 %v471
        %661 = vmatprep.subr.mxu0 %v478
        %662 = vmatpush1.msra.mxu0 %v477
        %663 = vmatprep.subr.mxu0 %v484
        %664 = vmatpush1.msra.mxu0 %v483
        %665 = vmatprep.subr.mxu0 %v490
        %666 = vmatpush1.msra.mxu0 %v489
        %667 = vmatprep.subr.mxu0 %v496
        %668 = vmatpush1.msra.mxu0 %v495
        %669 = vmatprep.subr.mxu0 %v502
        %670 = vmatpush1.msra.mxu0 %v501
        %671 = vmatprep.subr.mxu0 %v508
        %672 = vmatpush1.msra.mxu0 %v507
        %673 = vmatprep.subr.mxu0 %v514
        %674 = vmatpush1.msra.mxu0 %v513
        %675 = vmatprep.subr.mxu0 %v520
        %676 = vmatpush1.msra.mxu0 %v519
        %677 = vmatprep.subr.mxu0 %v526
        %678 = vmatpush1.msra.mxu0 %v525
        %679 = vmatprep.subr.mxu0 %v532
        %680 = vmatpush1.msra.mxu0 %v531
        %681 = vmatprep.subr.mxu0 %v538
        %682 = vmatpush1.msra.mxu0 %v537
        %683 = vmatprep.subr.mxu0 %v544
        %684 = vmatpush1.msra.mxu0 %v543
        %685 = vmatprep.subr.mxu0 %v550
        %686 = vmatpush1.msra.mxu0 %v549
        %687 = vmatprep.subr.mxu0 %v556
        %688 = vmatpush1.msra.mxu0 %v555
        %689 = vmatprep.subr.mxu0 %v562
        %690 = vmatpush1.msra.mxu0 %v561
        %691 = vmatprep.subr.mxu0 %v568
        %692 = vmatpush1.msra.mxu0 %v567
        %693 = vmatprep.subr.mxu0 %v574
        %694 = vmatpush1.msra.mxu0 %v573
        %695 = vmatprep.subr.mxu0 %v580
        %696 = vmatpush1.msra.mxu0 %v579
        %697 = vmatprep.subr.mxu0 %v586
        %698 = vmatpush1.msra.mxu0 %v585
        %699 = vmatprep.subr.mxu0 %v592
        %700 = vmatpush1.msra.mxu0 %v591
        %701 = vmatprep.subr.mxu0 %v598
        %702 = vmatpush1.msra.mxu0 %v597
        %703 = vmatprep.subr.mxu0 %v604
        %704 = vmatpush1.msra.mxu0 %v603
        %705 = vmatprep.mubr.f32.mxu0 %v414
        %706 = vmatmul.mubr.f32.gmra.mrb[0].mxu0 %v413
        %v707 = vpop.f32.mrb[0].mxu0
        %v708 = vadd.f32 %v614, %v707
        %v709 = vpop.f32.mrb[0].mxu0
        %v710 = vadd.f32 %v618, %v709
        %711 = vmatprep.mubr.f32.mxu0 %v416
        %712 = vmatmul.mubr.f32.gmra.mrb[0].mxu0 %v415
        %v713 = vpop.f32.mrb[0].mxu0
        %v714 = vadd.f32 %v614, %v713
        %v715 = vpop.f32.mrb[0].mxu0
        %v716 = vadd.f32 %v618, %v715
        %717 = vdwg.mxu0
        %718 = vmatprep.subr.mxu0 %v420
        %719 = vmatpush1.msra.mxu0 %v419
        %720 = vmatprep.subr.mxu0 %v426
        %721 = vmatpush1.msra.mxu0 %v425
        %722 = vmatprep.subr.mxu0 %v432
        %723 = vmatpush1.msra.mxu0 %v431
        %724 = vmatprep.subr.mxu0 %v438
        %725 = vmatpush1.msra.mxu0 %v437
        %726 = vmatprep.subr.mxu0 %v444
        %727 = vmatpush1.msra.mxu0 %v443
        %728 = vmatprep.subr.mxu0 %v450
        %729 = vmatpush1.msra.mxu0 %v449
        %730 = vmatprep.subr.mxu0 %v456
        %731 = vmatpush1.msra.mxu0 %v455
        %732 = vmatprep.subr.mxu0 %v462
        %733 = vmatpush1.msra.mxu0 %v461
        %734 = vmatprep.subr.mxu0 %v468
        %735 = vmatpush1.msra.mxu0 %v467
        %736 = vmatprep.subr.mxu0 %v474
        %737 = vmatpush1.msra.mxu0 %v473
        %738 = vmatprep.subr.mxu0 %v480
        %739 = vmatpush1.msra.mxu0 %v479
        %740 = vmatprep.subr.mxu0 %v486
        %741 = vmatpush1.msra.mxu0 %v485
        %742 = vmatprep.subr.mxu0 %v492
        %743 = vmatpush1.msra.mxu0 %v491
        %744 = vmatprep.subr.mxu0 %v498
        %745 = vmatpush1.msra.mxu0 %v497
        %746 = vmatprep.subr.mxu0 %v504
        %747 = vmatpush1.msra.mxu0 %v503
        %748 = vmatprep.subr.mxu0 %v510
        %749 = vmatpush1.msra.mxu0 %v509
        %750 = vmatprep.subr.mxu0 %v516
        %751 = vmatpush1.msra.mxu0 %v515
        %752 = vmatprep.subr.mxu0 %v522
        %753 = vmatpush1.msra.mxu0 %v521
        %754 = vmatprep.subr.mxu0 %v528
        %755 = vmatpush1.msra.mxu0 %v527
        %756 = vmatprep.subr.mxu0 %v534
        %757 = vmatpush1.msra.mxu0 %v533
        %758 = vmatprep.subr.mxu0 %v540
        %759 = vmatpush1.msra.mxu0 %v539
        %760 = vmatprep.subr.mxu0 %v546
        %761 = vmatpush1.msra.mxu0 %v545
        %762 = vmatprep.subr.mxu0 %v552
        %763 = vmatpush1.msra.mxu0 %v551
        %764 = vmatprep.subr.mxu0 %v558
        %765 = vmatpush1.msra.mxu0 %v557
        %766 = vmatprep.subr.mxu0 %v564
        %767 = vmatpush1.msra.mxu0 %v563
        %768 = vmatprep.subr.mxu0 %v570
        %769 = vmatpush1.msra.mxu0 %v569
        %770 = vmatprep.subr.mxu0 %v576
        %771 = vmatpush1.msra.mxu0 %v575
        %772 = vmatprep.subr.mxu0 %v582
        %773 = vmatpush1.msra.mxu0 %v581
        %774 = vmatprep.subr.mxu0 %v588
        %775 = vmatpush1.msra.mxu0 %v587
        %776 = vmatprep.subr.mxu0 %v594
        %777 = vmatpush1.msra.mxu0 %v593
        %778 = vmatprep.subr.mxu0 %v600
        %779 = vmatpush1.msra.mxu0 %v599
        %780 = vmatprep.subr.mxu0 %v606
        %781 = vmatpush1.msra.mxu0 %v605
        %782 = vmatprep.mubr.f32.mxu0 %v414
        %783 = vmatmul.mubr.f32.gmra.mrb[0].mxu0 %v413
        %v784 = vpop.f32.mrb[0].mxu0
        %v785 = vadd.f32 %v622, %v784
        %v786 = vpop.f32.mrb[0].mxu0
        %v787 = vadd.f32 %v626, %v786
        %788 = vmatprep.mubr.f32.mxu0 %v416
        %789 = vmatmul.mubr.f32.gmra.mrb[0].mxu0 %v415
        %v790 = vpop.f32.mrb[0].mxu0
        %v791 = vadd.f32 %v622, %v790
        %v792 = vpop.f32.mrb[0].mxu0
        %v793 = vadd.f32 %v626, %v792
        %794 = vdwg.mxu0
        %795 = vmatprep.subr.mxu0 %v422
        %796 = vmatpush1.msra.mxu0 %v421
        %797 = vmatprep.subr.mxu0 %v428
        %798 = vmatpush1.msra.mxu0 %v427
        %799 = vmatprep.subr.mxu0 %v434
        %800 = vmatpush1.msra.mxu0 %v433
        %801 = vmatprep.subr.mxu0 %v440
        %802 = vmatpush1.msra.mxu0 %v439
        %803 = vmatprep.subr.mxu0 %v446
        %804 = vmatpush1.msra.mxu0 %v445
        %805 = vmatprep.subr.mxu0 %v452
        %806 = vmatpush1.msra.mxu0 %v451
        %807 = vmatprep.subr.mxu0 %v458
        %808 = vmatpush1.msra.mxu0 %v457
        %809 = vmatprep.subr.mxu0 %v464
        %810 = vmatpush1.msra.mxu0 %v463
        %811 = vmatprep.subr.mxu0 %v470
        %812 = vmatpush1.msra.mxu0 %v469
        %813 = vmatprep.subr.mxu0 %v476
        %814 = vmatpush1.msra.mxu0 %v475
        %815 = vmatprep.subr.mxu0 %v482
        %816 = vmatpush1.msra.mxu0 %v481
        %817 = vmatprep.subr.mxu0 %v488
        %818 = vmatpush1.msra.mxu0 %v487
        %819 = vmatprep.subr.mxu0 %v494
        %820 = vmatpush1.msra.mxu0 %v493
        %821 = vmatprep.subr.mxu0 %v500
        %822 = vmatpush1.msra.mxu0 %v499
        %823 = vmatprep.subr.mxu0 %v506
        %824 = vmatpush1.msra.mxu0 %v505
        %825 = vmatprep.subr.mxu0 %v512
        %826 = vmatpush1.msra.mxu0 %v511
        %827 = vmatprep.subr.mxu0 %v518
        %828 = vmatpush1.msra.mxu0 %v517
        %829 = vmatprep.subr.mxu0 %v524
        %830 = vmatpush1.msra.mxu0 %v523
        %831 = vmatprep.subr.mxu0 %v530
        %832 = vmatpush1.msra.mxu0 %v529
        %833 = vmatprep.subr.mxu0 %v536
        %834 = vmatpush1.msra.mxu0 %v535
        %835 = vmatprep.subr.mxu0 %v542
        %836 = vmatpush1.msra.mxu0 %v541
        %837 = vmatprep.subr.mxu0 %v548
        %838 = vmatpush1.msra.mxu0 %v547
        %839 = vmatprep.subr.mxu0 %v554
        %840 = vmatpush1.msra.mxu0 %v553
        %841 = vmatprep.subr.mxu0 %v560
        %842 = vmatpush1.msra.mxu0 %v559
        %843 = vmatprep.subr.mxu0 %v566
        %844 = vmatpush1.msra.mxu0 %v565
        %845 = vmatprep.subr.mxu0 %v572
        %846 = vmatpush1.msra.mxu0 %v571
        %847 = vmatprep.subr.mxu0 %v578
        %848 = vmatpush1.msra.mxu0 %v577
        %849 = vmatprep.subr.mxu0 %v584
        %850 = vmatpush1.msra.mxu0 %v583
        %851 = vmatprep.subr.mxu0 %v590
        %852 = vmatpush1.msra.mxu0 %v589
        %853 = vmatprep.subr.mxu0 %v596
        %854 = vmatpush1.msra.mxu0 %v595
        %855 = vmatprep.subr.mxu0 %v602
        %856 = vmatpush1.msra.mxu0 %v601
        %857 = vmatprep.subr.mxu0 %v608
        %858 = vmatpush1.msra.mxu0 %v607
        %859 = vmatprep.mubr.f32.mxu0 %v414
        %860 = vmatmul.mubr.f32.gmra.mrb[0].mxu0 %v413
        %v861 = vpop.f32.mrb[0].mxu0
        %v862 = vadd.f32 %v630, %v861
        %v863 = vpop.f32.mrb[0].mxu0
        %v864 = vadd.f32 %v634, %v863
        %865 = vmatprep.mubr.f32.mxu0 %v416
        %866 = vmatmul.mubr.f32.gmra.mrb[0].mxu0 %v415
        %v867 = vpop.f32.mrb[0].mxu0
        %v868 = vadd.f32 %v630, %v867
        %v869 = vpop.f32.mrb[0].mxu0
        %v870 = vadd.f32 %v634, %v869
        %871 = vdwg.mxu0
        %v872 = vmul.f32 %v708, 0.088388346
        %v873 = vmul.f32 %v710, 0.088388346
        %v874 = vmul.f32 %v714, 0.088388346
        %v875 = vmul.f32 %v716, 0.088388346
        %s876 = sld [smem:[#allocation4 + %s32]]
        %v877 = vlaneseq
        %v878 = vand.u32 %v877, 127
        %v879 = vstv %s876
        %vm880 = vcmp.lt.s32.totalorder %v878, %v879
        %v881 = vsel %vm880, 0.0, -1e+09
        %882 = vmatprep.subr.mxu0 0.0
        %883 = vmatpush1.xpose.msra.mxu0 %v785
        %884 = vmatprep.subr.mxu0 0.0
        %885 = vmatpush1.xpose.msra.mxu0 %v791
        %886 = vmatprep.subr.mxu0 0.0
        %887 = vmatpush1.xpose.msra.mxu0 0.0
        %888 = vmatprep.subr.mxu0 0.0
        %889 = vmatpush1.xpose.msra.mxu0 0.0
        %890 = vmatprep.subr.mxu0 0.0
        %891 = vmatpush1.xpose.msra.mxu0 0.0
        %892 = vmatprep.subr.mxu0 0.0
        %893 = vmatpush1.xpose.msra.mxu0 0.0
        %894 = vmatprep.subr.mxu0 0.0
        %895 = vmatpush1.xpose.msra.mxu0 0.0
        %896 = vmatprep.subr.mxu0 0.0
        %897 = vmatpush1.xpose.msra.mxu0 0.0
        %898 = vmatprep.subr.mxu0 0.0
        %899 = vmatpush1.xpose.msra.mxu0 0.0
        %900 = vmatprep.subr.mxu0 0.0
        %901 = vmatpush1.xpose.msra.mxu0 0.0
        %902 = vmatprep.subr.mxu0 0.0
        %903 = vmatpush1.xpose.msra.mxu0 0.0
        %904 = vmatprep.subr.mxu0 0.0
        %905 = vmatpush1.xpose.msra.mxu0 0.0
        %906 = vmatprep.subr.mxu0 0.0
        %907 = vmatpush1.xpose.msra.mxu0 0.0
        %908 = vmatprep.subr.mxu0 0.0
        %909 = vmatpush1.xpose.msra.mxu0 0.0
        %910 = vmatprep.subr.mxu0 0.0
        %911 = vmatpush1.xpose.msra.mxu0 0.0
        %912 = vmatprep.subr.mxu0 0.0
        %913 = vmatpush1.xpose.msra.mxu0 0.0
        %914 = vmatprep.subr.mxu0 0.0
        %915 = vmatpush1.xpose.msra.mxu0 0.0
        %916 = vmatprep.subr.mxu0 0.0
        %917 = vmatpush1.xpose.msra.mxu0 0.0
        %918 = vmatprep.subr.mxu0 0.0
        %919 = vmatpush1.xpose.msra.mxu0 0.0
        %920 = vmatprep.subr.mxu0 0.0
        %921 = vmatpush1.xpose.msra.mxu0 0.0
        %922 = vmatprep.subr.mxu0 0.0
        %923 = vmatpush1.xpose.msra.mxu0 0.0
        %924 = vmatprep.subr.mxu0 0.0
        %925 = vmatpush1.xpose.msra.mxu0 0.0
        %926 = vmatprep.subr.mxu0 0.0
        %927 = vmatpush1.xpose.msra.mxu0 0.0
        %928 = vmatprep.subr.mxu0 0.0
        %929 = vmatpush1.xpose.msra.mxu0 0.0
        %930 = vmatprep.subr.mxu0 0.0
        %931 = vmatpush1.xpose.msra.mxu0 0.0
        %932 = vmatprep.subr.mxu0 0.0
        %933 = vmatpush1.xpose.msra.mxu0 0.0
        %934 = vmatprep.subr.mxu0 0.0
        %935 = vmatpush1.xpose.msra.mxu0 0.0
        %936 = vmatprep.subr.mxu0 0.0
        %937 = vmatpush1.xpose.msra.mxu0 0.0
        %938 = vmatprep.subr.mxu0 0.0
        %939 = vmatpush1.xpose.msra.mxu0 0.0
        %940 = vmatprep.subr.mxu0 0.0
        %941 = vmatpush1.xpose.msra.mxu0 0.0
        %942 = vmatprep.subr.mxu0 0.0
        %943 = vmatpush1.xpose.msra.mxu0 0.0
        %944 = vmatprep.subr.mxu0 0.0
        %945 = vmatpush1.xpose.msra.mxu0 0.0
        %946 = vmatprep.mubr.f32.mxu0 0.0
        %947 = vmatmul.mubr.f32.gmra.mrb[0].mxu0 %v872
        %v948 = vpop.f32.mrb[0].mxu0
        %v949 = vadd.f32 %v881, %v948
        %v950 = vpop.f32.mrb[0].mxu0
        %951 = vmatprep.mubr.f32.mxu0 0.0
        %952 = vmatmul.mubr.f32.gmra.mrb[0].mxu0 %v874
        %v953 = vpop.f32.mrb[0].mxu0
        %v954 = vadd.f32 %v881, %v953
        %v955 = vpop.f32.mrb[0].mxu0
        %956 = vdwg.mxu0
        %vm957 = vcmask 130048
        %v958 = vsel %vm957, %v949, -inf
        %959 = vmax.xlane.f32.xlu0 %v958
        %v960 = vpop.xlane.xlu0 %959
        %v961 = vsel %vm957, %v954, -inf
        %962 = vmax.xlane.f32.xlu0 %v961
        %v963 = vpop.xlane.xlu0 %962
        %v964 = vsub.f32 %v949, %v960
        %v965 = vsub.f32 %v954, %v963
        %v966 = vmul.f32 %v964, 1.442695
        %v967 = vpow.pop %v966
        %v968 = vmul.f32 %v965, 1.442695
        %v969 = vpow.pop %v968
        %v970 = vsel %vm957, %v967, 0.0
        %971 = vadd.xlane.f32.xlu0 %v970
        %v972 = vpop.xlane.xlu0 %971
        %v973 = vsel %vm957, %v969, 0.0
        %974 = vadd.xlane.f32.xlu0 %v973
        %v975 = vpop.xlane.xlu0 %974
        %v976 = vrcp.pop %v972
        %v977 = vrcp.pop %v975
        %v978 = vmul.f32 %v967, %v976
        %v979 = vmul.f32 %v969, %v977
        %v981 = vsel %vm957, %v978, 0
        %v984 = vsel %vm957, %v979, 0
        %986 = vmatprep.subr.mxu0 0.0
        %987 = vmatpush1.msra.mxu0 %v862
        %988 = vmatprep.subr.mxu0 0.0
        %989 = vmatpush1.msra.mxu0 %v868
        %990 = vmatprep.subr.mxu0 0.0
        %991 = vmatpush1.msra.mxu0 0.0
        %992 = vmatprep.subr.mxu0 0.0
        %993 = vmatpush1.msra.mxu0 0.0
        %994 = vmatprep.subr.mxu0 0.0
        %995 = vmatpush1.msra.mxu0 0.0
        %996 = vmatprep.subr.mxu0 0.0
        %997 = vmatpush1.msra.mxu0 0.0
        %998 = vmatprep.subr.mxu0 0.0
        %999 = vmatpush1.msra.mxu0 0.0
        %1000 = vmatprep.subr.mxu0 0.0
        %1001 = vmatpush1.msra.mxu0 0.0
        %1002 = vmatprep.subr.mxu0 0.0
        %1003 = vmatpush1.msra.mxu0 0.0
        %1004 = vmatprep.subr.mxu0 0.0
        %1005 = vmatpush1.msra.mxu0 0.0
        %1006 = vmatprep.subr.mxu0 0.0
        %1007 = vmatpush1.msra.mxu0 0.0
        %1008 = vmatprep.subr.mxu0 0.0
        %1009 = vmatpush1.msra.mxu0 0.0
        %1010 = vmatprep.subr.mxu0 0.0
        %1011 = vmatpush1.msra.mxu0 0.0
        %1012 = vmatprep.subr.mxu0 0.0
        %1013 = vmatpush1.msra.mxu0 0.0
        %1014 = vmatprep.subr.mxu0 0.0
        %1015 = vmatpush1.msra.mxu0 0.0
        %1016 = vmatprep.subr.mxu0 0.0
        %1017 = vmatpush1.msra.mxu0 0.0
        %1018 = vmatprep.subr.mxu0 0.0
        %1019 = vmatpush1.msra.mxu0 0.0
        %1020 = vmatprep.subr.mxu0 0.0
        %1021 = vmatpush1.msra.mxu0 0.0
        %1022 = vmatprep.subr.mxu0 0.0
        %1023 = vmatpush1.msra.mxu0 0.0
        %1024 = vmatprep.subr.mxu0 0.0
        %1025 = vmatpush1.msra.mxu0 0.0
        %1026 = vmatprep.subr.mxu0 0.0
        %1027 = vmatpush1.msra.mxu0 0.0
        %1028 = vmatprep.subr.mxu0 0.0
        %1029 = vmatpush1.msra.mxu0 0.0
        %1030 = vmatprep.subr.mxu0 0.0
        %1031 = vmatpush1.msra.mxu0 0.0
        %1032 = vmatprep.subr.mxu0 0.0
        %1033 = vmatpush1.msra.mxu0 0.0
        %1034 = vmatprep.subr.mxu0 0.0
        %1035 = vmatpush1.msra.mxu0 0.0
        %1036 = vmatprep.subr.mxu0 0.0
        %1037 = vmatpush1.msra.mxu0 0.0
        %1038 = vmatprep.subr.mxu0 0.0
        %1039 = vmatpush1.msra.mxu0 0.0
        %1040 = vmatprep.subr.mxu0 0.0
        %1041 = vmatpush1.msra.mxu0 0.0
        %1042 = vmatprep.subr.mxu0 0.0
        %1043 = vmatpush1.msra.mxu0 0.0
        %1044 = vmatprep.subr.mxu0 0.0
        %1045 = vmatpush1.msra.mxu0 0.0
        %1046 = vmatprep.subr.mxu0 0.0
        %1047 = vmatpush1.msra.mxu0 0.0
        %1048 = vmatprep.subr.mxu0 0.0
        %1049 = vmatpush1.msra.mxu0 0.0
        %1050 = vmatprep.mubr.f32.mxu0 0.0
        %1051 = vmatmul.mubr.f32.gmra.mrb[0].mxu0 %v981
        %v1052 = vpop.f32.mrb[0].mxu0
        %v1053 = vadd.f32 0.0, %v1052
        %v1054 = vpop.f32.mrb[0].mxu0
        %1055 = vmatprep.mubr.f32.mxu0 0.0
        %1056 = vmatmul.mubr.f32.gmra.mrb[0].mxu0 %v984
        %v1057 = vpop.f32.mrb[0].mxu0
        %v1058 = vadd.f32 0.0, %v1057
        %v1059 = vpop.f32.mrb[0].mxu0
        %1060 = vdwg.mxu0
        %1061 = vst [vmem:[#allocation2] sm:$0xff] %v1053
        %1062 = vst [vmem:[#allocation2 + $0x10] sm:$0xff] %v1058
        %1063 = vmatprep.subr.mxu0 0.0
        %1064 = vmatpush1.xpose.msra.mxu0 %v787
        %1065 = vmatprep.subr.mxu0 0.0
        %1066 = vmatpush1.xpose.msra.mxu0 %v793
        %1067 = vmatprep.subr.mxu0 0.0
        %1068 = vmatpush1.xpose.msra.mxu0 0.0
        %1069 = vmatprep.subr.mxu0 0.0
        %1070 = vmatpush1.xpose.msra.mxu0 0.0
        %1071 = vmatprep.subr.mxu0 0.0
        %1072 = vmatpush1.xpose.msra.mxu0 0.0
        %1073 = vmatprep.subr.mxu0 0.0
        %1074 = vmatpush1.xpose.msra.mxu0 0.0
        %1075 = vmatprep.subr.mxu0 0.0
        %1076 = vmatpush1.xpose.msra.mxu0 0.0
        %1077 = vmatprep.subr.mxu0 0.0
        %1078 = vmatpush1.xpose.msra.mxu0 0.0
        %1079 = vmatprep.subr.mxu0 0.0
        %1080 = vmatpush1.xpose.msra.mxu0 0.0
        %1081 = vmatprep.subr.mxu0 0.0
        %1082 = vmatpush1.xpose.msra.mxu0 0.0
        %1083 = vmatprep.subr.mxu0 0.0
        %1084 = vmatpush1.xpose.msra.mxu0 0.0
        %1085 = vmatprep.subr.mxu0 0.0
        %1086 = vmatpush1.xpose.msra.mxu0 0.0
        %1087 = vmatprep.subr.mxu0 0.0
        %1088 = vmatpush1.xpose.msra.mxu0 0.0
        %1089 = vmatprep.subr.mxu0 0.0
        %1090 = vmatpush1.xpose.msra.mxu0 0.0
        %1091 = vmatprep.subr.mxu0 0.0
        %1092 = vmatpush1.xpose.msra.mxu0 0.0
        %1093 = vmatprep.subr.mxu0 0.0
        %1094 = vmatpush1.xpose.msra.mxu0 0.0
        %1095 = vmatprep.subr.mxu0 0.0
        %1096 = vmatpush1.xpose.msra.mxu0 0.0
        %1097 = vmatprep.subr.mxu0 0.0
        %1098 = vmatpush1.xpose.msra.mxu0 0.0
        %1099 = vmatprep.subr.mxu0 0.0
        %1100 = vmatpush1.xpose.msra.mxu0 0.0
        %1101 = vmatprep.subr.mxu0 0.0
        %1102 = vmatpush1.xpose.msra.mxu0 0.0
        %1103 = vmatprep.subr.mxu0 0.0
        %1104 = vmatpush1.xpose.msra.mxu0 0.0
        %1105 = vmatprep.subr.mxu0 0.0
        %1106 = vmatpush1.xpose.msra.mxu0 0.0
        %1107 = vmatprep.subr.mxu0 0.0
        %1108 = vmatpush1.xpose.msra.mxu0 0.0
        %1109 = vmatprep.subr.mxu0 0.0
        %1110 = vmatpush1.xpose.msra.mxu0 0.0
        %1111 = vmatprep.subr.mxu0 0.0
        %1112 = vmatpush1.xpose.msra.mxu0 0.0
        %1113 = vmatprep.subr.mxu0 0.0
        %1114 = vmatpush1.xpose.msra.mxu0 0.0
        %1115 = vmatprep.subr.mxu0 0.0
        %1116 = vmatpush1.xpose.msra.mxu0 0.0
        %1117 = vmatprep.subr.mxu0 0.0
        %1118 = vmatpush1.xpose.msra.mxu0 0.0
        %1119 = vmatprep.subr.mxu0 0.0
        %1120 = vmatpush1.xpose.msra.mxu0 0.0
        %1121 = vmatprep.subr.mxu0 0.0
        %1122 = vmatpush1.xpose.msra.mxu0 0.0
        %1123 = vmatprep.subr.mxu0 0.0
        %1124 = vmatpush1.xpose.msra.mxu0 0.0
        %1125 = vmatprep.subr.mxu0 0.0
        %1126 = vmatpush1.xpose.msra.mxu0 0.0
        %1127 = vmatprep.mubr.f32.mxu0 0.0
        %1128 = vmatmul.mubr.f32.gmra.mrb[0].mxu0 %v873
        %v1129 = vpop.f32.mrb[0].mxu0
        %v1130 = vadd.f32 %v881, %v1129
        %v1131 = vpop.f32.mrb[0].mxu0
        %1132 = vmatprep.mubr.f32.mxu0 0.0
        %1133 = vmatmul.mubr.f32.gmra.mrb[0].mxu0 %v875
        %v1134 = vpop.f32.mrb[0].mxu0
        %v1135 = vadd.f32 %v881, %v1134
        %v1136 = vpop.f32.mrb[0].mxu0
        %1137 = vdwg.mxu0
        %v1138 = vsel %vm957, %v1130, -inf
        %1139 = vmax.xlane.f32.xlu0 %v1138
        %v1140 = vpop.xlane.xlu0 %1139
        %v1141 = vsel %vm957, %v1135, -inf
        %1142 = vmax.xlane.f32.xlu0 %v1141
        %v1143 = vpop.xlane.xlu0 %1142
        %v1144 = vsub.f32 %v1130, %v1140
        %v1145 = vsub.f32 %v1135, %v1143
        %v1146 = vmul.f32 %v1144, 1.442695
        %v1147 = vpow.pop %v1146
        %v1148 = vmul.f32 %v1145, 1.442695
        %v1149 = vpow.pop %v1148
        %v1150 = vsel %vm957, %v1147, 0.0
        %1151 = vadd.xlane.f32.xlu0 %v1150
        %v1152 = vpop.xlane.xlu0 %1151
        %v1153 = vsel %vm957, %v1149, 0.0
        %1154 = vadd.xlane.f32.xlu0 %v1153
        %v1155 = vpop.xlane.xlu0 %1154
        %v1156 = vrcp.pop %v1152
        %v1157 = vrcp.pop %v1155
        %v1158 = vmul.f32 %v1147, %v1156
        %v1159 = vmul.f32 %v1149, %v1157
        %v1161 = vsel %vm957, %v1158, 0
        %v1164 = vsel %vm957, %v1159, 0
        %1166 = vmatprep.subr.mxu0 0.0
        %1167 = vmatpush1.msra.mxu0 %v864
        %1168 = vmatprep.subr.mxu0 0.0
        %1169 = vmatpush1.msra.mxu0 %v870
        %1170 = vmatprep.subr.mxu0 0.0
        %1171 = vmatpush1.msra.mxu0 0.0
        %1172 = vmatprep.subr.mxu0 0.0
        %1173 = vmatpush1.msra.mxu0 0.0
        %1174 = vmatprep.subr.mxu0 0.0
        %1175 = vmatpush1.msra.mxu0 0.0
        %1176 = vmatprep.subr.mxu0 0.0
        %1177 = vmatpush1.msra.mxu0 0.0
        %1178 = vmatprep.subr.mxu0 0.0
        %1179 = vmatpush1.msra.mxu0 0.0
        %1180 = vmatprep.subr.mxu0 0.0
        %1181 = vmatpush1.msra.mxu0 0.0
        %1182 = vmatprep.subr.mxu0 0.0
        %1183 = vmatpush1.msra.mxu0 0.0
        %1184 = vmatprep.subr.mxu0 0.0
        %1185 = vmatpush1.msra.mxu0 0.0
        %1186 = vmatprep.subr.mxu0 0.0
        %1187 = vmatpush1.msra.mxu0 0.0
        %1188 = vmatprep.subr.mxu0 0.0
        %1189 = vmatpush1.msra.mxu0 0.0
        %1190 = vmatprep.subr.mxu0 0.0
        %1191 = vmatpush1.msra.mxu0 0.0
        %1192 = vmatprep.subr.mxu0 0.0
        %1193 = vmatpush1.msra.mxu0 0.0
        %1194 = vmatprep.subr.mxu0 0.0
        %1195 = vmatpush1.msra.mxu0 0.0
        %1196 = vmatprep.subr.mxu0 0.0
        %1197 = vmatpush1.msra.mxu0 0.0
        %1198 = vmatprep.subr.mxu0 0.0
        %1199 = vmatpush1.msra.mxu0 0.0
        %1200 = vmatprep.subr.mxu0 0.0
        %1201 = vmatpush1.msra.mxu0 0.0
        %1202 = vmatprep.subr.mxu0 0.0
        %1203 = vmatpush1.msra.mxu0 0.0
        %1204 = vmatprep.subr.mxu0 0.0
        %1205 = vmatpush1.msra.mxu0 0.0
        %1206 = vmatprep.subr.mxu0 0.0
        %1207 = vmatpush1.msra.mxu0 0.0
        %1208 = vmatprep.subr.mxu0 0.0
        %1209 = vmatpush1.msra.mxu0 0.0
        %1210 = vmatprep.subr.mxu0 0.0
        %1211 = vmatpush1.msra.mxu0 0.0
        %1212 = vmatprep.subr.mxu0 0.0
        %1213 = vmatpush1.msra.mxu0 0.0
        %1214 = vmatprep.subr.mxu0 0.0
        %1215 = vmatpush1.msra.mxu0 0.0
        %1216 = vmatprep.subr.mxu0 0.0
        %1217 = vmatpush1.msra.mxu0 0.0
        %1218 = vmatprep.subr.mxu0 0.0
        %1219 = vmatpush1.msra.mxu0 0.0
        %1220 = vmatprep.subr.mxu0 0.0
        %1221 = vmatpush1.msra.mxu0 0.0
        %1222 = vmatprep.subr.mxu0 0.0
        %1223 = vmatpush1.msra.mxu0 0.0
        %1224 = vmatprep.subr.mxu0 0.0
        %1225 = vmatpush1.msra.mxu0 0.0
        %1226 = vmatprep.subr.mxu0 0.0
        %1227 = vmatpush1.msra.mxu0 0.0
        %1228 = vmatprep.subr.mxu0 0.0
        %1229 = vmatpush1.msra.mxu0 0.0
        %1230 = vmatprep.mubr.f32.mxu0 0.0
        %1231 = vmatmul.mubr.f32.gmra.mrb[0].mxu0 %v1161
        %v1232 = vpop.f32.mrb[0].mxu0
        %v1233 = vadd.f32 0.0, %v1232
        %v1234 = vpop.f32.mrb[0].mxu0
        %1235 = vmatprep.mubr.f32.mxu0 0.0
        %1236 = vmatmul.mubr.f32.gmra.mrb[0].mxu0 %v1164
        %v1237 = vpop.f32.mrb[0].mxu0
        %v1238 = vadd.f32 0.0, %v1237
        %v1239 = vpop.f32.mrb[0].mxu0
        %1240 = vdwg.mxu0
        %1241 = vst [vmem:[#allocation2 + $0x8] sm:$0xff] %v1233
        %1242 = vst [vmem:[#allocation2 + $0x18] sm:$0xff] %v1238
        %v1243 = vld [vmem:[#allocation2] sm:$0xff]
        %v1244 = vld [vmem:[#allocation2 + $0x8] sm:$0xff]
        %v1245 = vld [vmem:[#allocation2 + $0x10] sm:$0xff]
        %v1246 = vld [vmem:[#allocation2 + $0x18] sm:$0xff]
        %v1247 = vld [vmem:[#allocation10] sm:$0xff]
        %v1248 = vld [vmem:[#allocation10 + $0x8] sm:$0xff]
        %v1249 = vld [vmem:[#allocation10 + $0x10] sm:$0xff]
        %v1250 = vld [vmem:[#allocation10 + $0x18] sm:$0xff]
        %v1251 = vld [vmem:[#allocation10 + $0x20] sm:$0xff]
        %v1252 = vld [vmem:[#allocation10 + $0x28] sm:$0xff]
        %v1253 = vld [vmem:[#allocation10 + $0x30] sm:$0xff]
        %v1254 = vld [vmem:[#allocation10 + $0x38] sm:$0xff]
        %v1255 = vld [vmem:[#allocation10 + $0x40] sm:$0xff]
        %v1256 = vld [vmem:[#allocation10 + $0x48] sm:$0xff]
        %v1257 = vld [vmem:[#allocation10 + $0x50] sm:$0xff]
        %v1258 = vld [vmem:[#allocation10 + $0x58] sm:$0xff]
        %v1259 = vld [vmem:[#allocation10 + $0x60] sm:$0xff]
        %v1260 = vld [vmem:[#allocation10 + $0x68] sm:$0xff]
        %v1261 = vld [vmem:[#allocation10 + $0x70] sm:$0xff]
        %v1262 = vld [vmem:[#allocation10 + $0x78] sm:$0xff]
        %v1263 = vld [vmem:[#allocation10 + $0x80] sm:$0xff]
        %v1264 = vld [vmem:[#allocation10 + $0x88] sm:$0xff]
        %v1265 = vld [vmem:[#allocation10 + $0x90] sm:$0xff]
        %v1266 = vld [vmem:[#allocation10 + $0x98] sm:$0xff]
        %v1267 = vld [vmem:[#allocation10 + $0xa0] sm:$0xff]
        %v1268 = vld [vmem:[#allocation10 + $0xa8] sm:$0xff]
        %v1269 = vld [vmem:[#allocation10 + $0xb0] sm:$0xff]
        %v1270 = vld [vmem:[#allocation10 + $0xb8] sm:$0xff]
        %v1271 = vld [vmem:[#allocation10 + $0xc0] sm:$0xff]
        %v1272 = vld [vmem:[#allocation10 + $0xc8] sm:$0xff]
        %v1273 = vld [vmem:[#allocation10 + $0xd0] sm:$0xff]
        %v1274 = vld [vmem:[#allocation10 + $0xd8] sm:$0xff]
        %v1275 = vld [vmem:[#allocation10 + $0xe0] sm:$0xff]
        %v1276 = vld [vmem:[#allocation10 + $0xe8] sm:$0xff]
        %v1277 = vld [vmem:[#allocation10 + $0xf0] sm:$0xff]
        %v1278 = vld [vmem:[#allocation10 + $0xf8] sm:$0xff]
        %v1279 = vld [vmem:[#allocation10 + $0x100] sm:$0xff]
        %v1280 = vld [vmem:[#allocation10 + $0x108] sm:$0xff]
        %v1281 = vld [vmem:[#allocation10 + $0x110] sm:$0xff]
        %v1282 = vld [vmem:[#allocation10 + $0x118] sm:$0xff]
        %v1283 = vld [vmem:[#allocation10 + $0x120] sm:$0xff]
        %v1284 = vld [vmem:[#allocation10 + $0x128] sm:$0xff]
        %v1285 = vld [vmem:[#allocation10 + $0x130] sm:$0xff]
        %v1286 = vld [vmem:[#allocation10 + $0x138] sm:$0xff]
        %v1287 = vld [vmem:[#allocation10 + $0x140] sm:$0xff]
        %v1288 = vld [vmem:[#allocation10 + $0x148] sm:$0xff]
        %v1289 = vld [vmem:[#allocation10 + $0x150] sm:$0xff]
        %v1290 = vld [vmem:[#allocation10 + $0x158] sm:$0xff]
        %v1291 = vld [vmem:[#allocation10 + $0x160] sm:$0xff]
        %v1292 = vld [vmem:[#allocation10 + $0x168] sm:$0xff]
        %v1293 = vld [vmem:[#allocation10 + $0x170] sm:$0xff]
        %v1294 = vld [vmem:[#allocation10 + $0x178] sm:$0xff]
        %v1295 = vld [vmem:[#allocation10 + $0x180] sm:$0xff]
        %v1296 = vld [vmem:[#allocation10 + $0x188] sm:$0xff]
        %v1297 = vld [vmem:[#allocation10 + $0x190] sm:$0xff]
        %v1298 = vld [vmem:[#allocation10 + $0x198] sm:$0xff]
        %v1299 = vld [vmem:[#allocation10 + $0x1a0] sm:$0xff]
        %v1300 = vld [vmem:[#allocation10 + $0x1a8] sm:$0xff]
        %v1301 = vld [vmem:[#allocation10 + $0x1b0] sm:$0xff]
        %v1302 = vld [vmem:[#allocation10 + $0x1b8] sm:$0xff]
        %v1303 = vld [vmem:[#allocation10 + $0x1c0] sm:$0xff]
        %v1304 = vld [vmem:[#allocation10 + $0x1c8] sm:$0xff]
        %v1305 = vld [vmem:[#allocation10 + $0x1d0] sm:$0xff]
        %v1306 = vld [vmem:[#allocation10 + $0x1d8] sm:$0xff]
        %v1307 = vld [vmem:[#allocation10 + $0x1e0] sm:$0xff]
        %v1308 = vld [vmem:[#allocation10 + $0x1e8] sm:$0xff]
        %v1309 = vld [vmem:[#allocation10 + $0x1f0] sm:$0xff]
        %v1310 = vld [vmem:[#allocation10 + $0x1f8] sm:$0xff]
        %v1311 = vld [vmem:[%s7] sm:$0x3]
        %v1313 = vlaneseq
        %v1314 = vshrl.u32 %v1313, 7
        %v1315 = vsub.s32 0, %v1314
        %v1316 = vrot.slane %v1311, %v1315
        %v1317 = vlaneseq
        %v1318 = vshrl.u32 %v1317, 7
        %v1319 = vsub.s32 1, %v1318
        %v1320 = vrot.slane %v1311, %v1319
        %1323 = vmatprep.subr.mxu0 %v1248
        %1324 = vmatpush1.msra.mxu0 %v1247
        %1325 = vmatprep.subr.mxu0 %v1250
        %1326 = vmatpush1.msra.mxu0 %v1249
        %1327 = vmatprep.subr.mxu0 %v1252
        %1328 = vmatpush1.msra.mxu0 %v1251
        %1329 = vmatprep.subr.mxu0 %v1254
        %1330 = vmatpush1.msra.mxu0 %v1253
        %1331 = vmatprep.subr.mxu0 %v1256
        %1332 = vmatpush1.msra.mxu0 %v1255
        %1333 = vmatprep.subr.mxu0 %v1258
        %1334 = vmatpush1.msra.mxu0 %v1257
        %1335 = vmatprep.subr.mxu0 %v1260
        %1336 = vmatpush1.msra.mxu0 %v1259
        %1337 = vmatprep.subr.mxu0 %v1262
        %1338 = vmatpush1.msra.mxu0 %v1261
        %1339 = vmatprep.subr.mxu0 %v1264
        %1340 = vmatpush1.msra.mxu0 %v1263
        %1341 = vmatprep.subr.mxu0 %v1266
        %1342 = vmatpush1.msra.mxu0 %v1265
        %1343 = vmatprep.subr.mxu0 %v1268
        %1344 = vmatpush1.msra.mxu0 %v1267
        %1345 = vmatprep.subr.mxu0 %v1270
        %1346 = vmatpush1.msra.mxu0 %v1269
        %1347 = vmatprep.subr.mxu0 %v1272
        %1348 = vmatpush1.msra.mxu0 %v1271
        %1349 = vmatprep.subr.mxu0 %v1274
        %1350 = vmatpush1.msra.mxu0 %v1273
        %1351 = vmatprep.subr.mxu0 %v1276
        %1352 = vmatpush1.msra.mxu0 %v1275
        %1353 = vmatprep.subr.mxu0 %v1278
        %1354 = vmatpush1.msra.mxu0 %v1277
        %1355 = vmatprep.subr.mxu0 %v1280
        %1356 = vmatpush1.msra.mxu0 %v1279
        %1357 = vmatprep.subr.mxu0 %v1282
        %1358 = vmatpush1.msra.mxu0 %v1281
        %1359 = vmatprep.subr.mxu0 %v1284
        %1360 = vmatpush1.msra.mxu0 %v1283
        %1361 = vmatprep.subr.mxu0 %v1286
        %1362 = vmatpush1.msra.mxu0 %v1285
        %1363 = vmatprep.subr.mxu0 %v1288
        %1364 = vmatpush1.msra.mxu0 %v1287
        %1365 = vmatprep.subr.mxu0 %v1290
        %1366 = vmatpush1.msra.mxu0 %v1289
        %1367 = vmatprep.subr.mxu0 %v1292
        %1368 = vmatpush1.msra.mxu0 %v1291
        %1369 = vmatprep.subr.mxu0 %v1294
        %1370 = vmatpush1.msra.mxu0 %v1293
        %1371 = vmatprep.subr.mxu0 %v1296
        %1372 = vmatpush1.msra.mxu0 %v1295
        %1373 = vmatprep.subr.mxu0 %v1298
        %1374 = vmatpush1.msra.mxu0 %v1297
        %1375 = vmatprep.subr.mxu0 %v1300
        %1376 = vmatpush1.msra.mxu0 %v1299
        %1377 = vmatprep.subr.mxu0 %v1302
        %1378 = vmatpush1.msra.mxu0 %v1301
        %1379 = vmatprep.subr.mxu0 %v1304
        %1380 = vmatpush1.msra.mxu0 %v1303
        %1381 = vmatprep.subr.mxu0 %v1306
        %1382 = vmatpush1.msra.mxu0 %v1305
        %1383 = vmatprep.subr.mxu0 %v1308
        %1384 = vmatpush1.msra.mxu0 %v1307
        %1385 = vmatprep.subr.mxu0 %v1310
        %1386 = vmatpush1.msra.mxu0 %v1309
        %1387 = vmatprep.mubr.f32.mxu0 %v1244
        %1388 = vmatmul.mubr.f32.gmra.mrb[0].mxu0 %v1243
        %v1389 = vpop.f32.mrb[0].mxu0
        %v1390 = vadd.f32 %v1316, %v1389
        %v1391 = vpop.f32.mrb[0].mxu0
        %v1392 = vadd.f32 %v1320, %v1391
        %1393 = vmatprep.mubr.f32.mxu0 %v1246
        %1394 = vmatmul.mubr.f32.gmra.mrb[0].mxu0 %v1245
        %v1395 = vpop.f32.mrb[0].mxu0
        %v1396 = vadd.f32 %v1316, %v1395
        %v1397 = vpop.f32.mrb[0].mxu0
        %v1398 = vadd.f32 %v1320, %v1397
        %1399 = vdwg.mxu0
        %v1400 = vadd.f32 %v333, %v1390
        %v1401 = vadd.f32 %v334, %v1392
        %v1402 = vadd.f32 %v335, %v1396
        %v1403 = vadd.f32 %v336, %v1398
        %1404 = vst [vmem:[%s332] sm:$0xff] %v1400
        %1405 = vst [vmem:[%s332 + $0x8] sm:$0xff] %v1401
        %1406 = vst [vmem:[%s332 + $0x10] sm:$0xff] %v1402
        %1407 = vst [vmem:[%s332 + $0x18] sm:$0xff] %v1403
        %s1408 = sand.u32 %s192, 1
        %s1409 = scalar_lea.sflag [#allocation7], %s1408
        %s1410 = sand.u32 %s192, 1
        %s1411 = smul.addr %s1410, 32
        %s1412 = scalar_lea.vmem [#allocation11], %s1411
        // Predicated region
        $region61: #{_attention_sublayer.1} parent=47 // pred_check
          %p1413 = pneg %p202
        $region62: #{_attention_sublayer.1} parent=47 // pred_check_branch
          %1415 = sbr.rel (%p1413) target = $region64
        $region63: #{_attention_sublayer.1} parent=47 // pred_region
          %s1417 = ssub.s32 512, 512
          %1418 = vsyncadd %s1409, %s1417
          %s1419 = smul.addr %s32, 4
          %s1420 = smul.addr %s1419, 128
          %s1421 = scalar_lea.hbm %s8, %s1420
          %s1422 = sshll.u32 %s1412, 4
          %s1423 = int_to_ptr.vmem [resolvable:$true] %s1422
          %1428 = dma.vmem_to_hbm [thread:$0]  %s1423, 512, %s1421, %s1409, 256, 256, 16
        $region64: #{_attention_sublayer.1} parent=47 // pred_fallthru
          _
      $region48: #{_attention_sublayer.1} parent=5 // pred_fallthru
        _
      %p1429 = scmp.le.s32.totalorder 2, %s27
      // Predicated region
      $region65: #{_attention_sublayer.1} parent=5 // pred_check
        %p1430 = pneg %p1429
      $region66: #{_attention_sublayer.1} parent=5 // pred_check_branch
        %1432 = sbr.rel (%p1430) target = $region68
      $region67: #{_attention_sublayer.1} parent=5 // pred_region
        %s1433 = ssub.s32 %s27, 2
        // Predicated region
        $region69: #{_attention_sublayer.1} parent=67 // pred_check
          %p1434 = pneg %p208
        $region70: #{_attention_sublayer.1} parent=67 // pred_check_branch
          %1436 = sbr.rel (%p1434) target = $region72
        $region71: #{_attention_sublayer.1} parent=67 // pred_region
          %s1437 = sand.u32 %s193, 1
          %s1438 = scalar_lea.sflag [#allocation7], %s1437
          %s1439 = sand.u32 %s193, 1
          %s1440 = smul.addr %s1439, 32
          %s1441 = scalar_lea.vmem [#allocation11], %s1440
          %1442 = dma.done %s1438, 512
        $region72: #{_attention_sublayer.1} parent=67 // pred_fallthru
          _
      $region68: #{_attention_sublayer.1} parent=5 // pred_fallthru
        _
    $region6: #{_attention_sublayer.1} parent=1 // loop_footer
      %s31 = sadd.s32 1, %s27
    $region7: #{_attention_sublayer.1} parent=1 // loop_footer_branch
      %26 = sbr.rel target = $region3
    $region8: #{_attention_sublayer.1} parent=1 // loop_exit
      _
    %1443 = vsyncpa [#allocation6], 1
    %s1444 = scalar_lea.sflag [#allocation6], 1
    %1445 = vsyncpa %s1444, 1
    %1446 = vsyncpa [#allocation9], 1
    %1447 = vsyncpa [#allocation7], 1
    %s1448 = scalar_lea.sflag [#allocation7], 1
    %1449 = vsyncpa %s1448, 1

</llo_original>
